<compile_context>
chip_gen: v7x
topology: tpu7x:2x2x1
jax: 0.10.0
libtpu: 0.0.40
codegen_flags: <defaults>
</compile_context>

<pallas_src>
from functools import partial

import jax
import jax.numpy as jnp
from jax import lax
from jax.experimental import pallas as pl
from jax.experimental.pallas import tpu as pltpu


# ----------------------------------------------------------------------------
# float16 precision emulation (on-register, pure f32/u32 ops -> always lowers)
# ----------------------------------------------------------------------------
def _f16_round(x):
    """Round an f32 tensor to float16 precision (round-to-nearest-even).

    Emulates PyTorch `.to(torch.float16)` for normal-range values:
      * mantissa rounded to 10 bits (RTNE, with correct carry into exponent)
      * values that round to >= 2**16 overflow to +/-inf (fp16 overflow)
    # TODO(synk): fp16 subnormal quantization (|x| < 2**-14) and NaN payloads are
    # not reproduced bit-exactly; negligible for this module's value range.
    """
    bits = pltpu.bitcast(x, jnp.uint32)
    round_bit = (bits >> 13) & jnp.uint32(1)
    rounded = (bits + jnp.uint32(0x0FFF) + round_bit) & jnp.uint32(0xFFFFE000)
    y = pltpu.bitcast(rounded, jnp.float32)
    pinf = jnp.float32(jnp.inf)
    ninf = jnp.float32(-jnp.inf)
    return jnp.where(jnp.abs(y) >= jnp.float32(65536.0),
                     jnp.where(x > 0, pinf, ninf), y)


# ----------------------------------------------------------------------------
# Kernel 1: fused QKV projection.
#   - contracts on the weight's LAST dim (no wrapper-side w.T transpose)
#   - emits q / k / v as three outputs (no jnp.split copies)
#   - applies the fp16 cast emulation on the outputs while they are in vregs
# ----------------------------------------------------------------------------
def _qkv_proj_kernel(x_ref, w_ref, q_ref, k_ref, v_ref, *, inner):
    x = x_ref[...]                                   # (tm, dim) f32
    dn = (((1,), (1,)), ((), ()))                    # x.dim <.> w.dim
    for i, out_ref in enumerate((q_ref, k_ref, v_ref)):
        w = w_ref[i * inner:(i + 1) * inner, :]      # (inner, dim) static VMEM slice
        y = lax.dot_general(x, w, dn, preferred_element_type=jnp.float32)
        out_ref[...] = _f16_round(y)                 # emulate q/k/v.to(float16) in-kernel


def qkv_projection(x2d, w_qkv, *, inner, block_m=256):
    M, dim = x2d.shape
    tm = M if M <= block_m else block_m              # row tiling -> pipelining + 2 TCs on v7x
    out = jax.ShapeDtypeStruct((M, inner), jnp.float32)
    flops = 2 * M * dim * 3 * inner
    bytes_accessed = 4 * (M * dim + 3 * inner * dim + 3 * M * inner)
    return pl.pallas_call(
        partial(_qkv_proj_kernel, inner=inner),
        out_shape=(out, out, out),
        grid=(pl.cdiv(M, tm),),
        in_specs=[
            pl.BlockSpec((tm, dim), lambda i: (i, 0)),
            pl.BlockSpec((3 * inner, dim), lambda i: (0, 0)),   # weight resident in VMEM
        ],
        out_specs=(
            pl.BlockSpec((tm, inner), lambda i: (i, 0)),
            pl.BlockSpec((tm, inner), lambda i: (i, 0)),
            pl.BlockSpec((tm, inner), lambda i: (i, 0)),
        ),
        compiler_params=pltpu.CompilerParams(dimension_semantics=("parallel",)),
        cost_estimate=pl.CostEstimate(flops=flops, transcendentals=0,
                                      bytes_accessed=bytes_accessed),
    )(x2d, w_qkv)


# ----------------------------------------------------------------------------
# Kernel 2: flash attention (all heads packed per step) fused with the fp16
# output emulation, the 'b h n d -> b n (h d)' rearrange and the out-projection.
# Grid = (batch, q tiles, kv tiles); kv axis is the innermost 'arbitrary' axis.
# ----------------------------------------------------------------------------
def _flash_attn_kernel(q_ref, k_ref, v_ref, wo_ref, o_ref,
                       m_sc, l_sc, acc_sc, *, scale):
    ki = pl.program_id(2)

    @pl.when(ki == 0)
    def _init():
        m_sc[...] = jnp.full(m_sc.shape, -jnp.inf, dtype=jnp.float32)
        l_sc[...] = jnp.zeros(l_sc.shape, dtype=jnp.float32)
        acc_sc[...] = jnp.zeros(acc_sc.shape, dtype=jnp.float32)

    # q/k/v already fp16-rounded by the projection kernel; fold scale into q
    # (touches N*D elements instead of the N*N score matrix).
    q = q_ref[...] * scale                            # (H, tq, D)
    k = k_ref[...]                                    # (H, tk, D)
    v = v_ref[...]                                    # (H, tk, D)

    s = jnp.einsum("hqd,hkd->hqk", q, k, preferred_element_type=jnp.float32)
    m_prev = m_sc[...]
    m_new = jnp.maximum(m_prev, jnp.max(s, axis=-1, keepdims=True))
    alpha = jnp.exp(m_prev - m_new)
    p = jnp.exp(s - m_new)
    l_sc[...] = alpha * l_sc[...] + jnp.sum(p, axis=-1, keepdims=True)
    acc_sc[...] = alpha * acc_sc[...] + jnp.einsum(
        "hqk,hkd->hqd", p, v, preferred_element_type=jnp.float32)
    m_sc[...] = m_new

    @pl.when(ki == pl.num_programs(2) - 1)
    def _finalize():
        out = acc_sc[...] * pl.reciprocal(l_sc[...], approx=True)   # (H, tq, D)
        out = _f16_round(out)          # the triton kernel emits fp16; then .to(float32)
        wo = wo_ref[...]               # (dim, inner) = (dim, H*D)
        heads, tq, d_head = out.shape
        dim_out = wo.shape[0]
        dn = (((1,), (1,)), ((), ()))
        acc = jnp.zeros((tq, dim_out), dtype=jnp.float32)
        # Fused 'b h n d -> b n (h d)' + to_out: sum_h out_h @ W_out[:, h*D:(h+1)*D].T
        for h in range(heads):
            acc = acc + lax.dot_general(out[h], wo[:, h * d_head:(h + 1) * d_head],
                                        dn, preferred_element_type=jnp.float32)
        o_ref[...] = acc               # (tq, dim) -- lane-dense final store


def fused_attention(q, k, v, w_out, *, scale, block_q=128, block_k=128):
    B, H, N, D = q.shape
    dim = w_out.shape[0]
    inner = H * D
    # Tile sizes: tq/tk <= 128 keeps per-step VMEM (q,k,v blocks + (H,tq,tk)
    # scores + scratch, double-buffered) well under v7x's 64 MiB per TC and
    # v5e/v6e defaults; raise block_q/block_k (and vmem_limit_bytes on v6e)
    # for large N if desired.
    tq = N if N <= block_q else block_q
    tk = N if N <= block_k else block_k
    assert N % tq == 0 and N % tk == 0, "sequence length must divide the q/kv tiles"

    flops = 4 * B * H * N * N * D + 2 * B * N * inner * dim
    bytes_accessed = 4 * (3 * B * H * N * D + dim * inner + B * N * dim)
    return pl.pallas_call(
        partial(_flash_attn_kernel, scale=scale),
        out_shape=jax.ShapeDtypeStruct((B, N, dim), jnp.float32),
        grid=(B, N // tq, N // tk),
        in_specs=[
            pl.BlockSpec((None, H, tq, D), lambda b, qi, ki: (b, 0, qi, 0)),
            pl.BlockSpec((None, H, tk, D), lambda b, qi, ki: (b, 0, ki, 0)),
            pl.BlockSpec((None, H, tk, D), lambda b, qi, ki: (b, 0, ki, 0)),
            pl.BlockSpec((dim, inner), lambda b, qi, ki: (0, 0)),   # W_out resident
        ],
        out_specs=pl.BlockSpec((None, tq, dim), lambda b, qi, ki: (b, qi, 0)),
        scratch_shapes=[
            pltpu.VMEM((H, tq, 1), jnp.float32),    # running max
            pltpu.VMEM((H, tq, 1), jnp.float32),    # running denom
            pltpu.VMEM((H, tq, D), jnp.float32),    # running numerator
        ],
        compiler_params=pltpu.CompilerParams(
            dimension_semantics=("parallel", "parallel", "arbitrary")),
        cost_estimate=pl.CostEstimate(flops=flops, transcendentals=B * H * N * N,
                                      bytes_accessed=bytes_accessed),
    )(q, k, v, w_out)


# ----------------------------------------------------------------------------
# Full module forward
# ----------------------------------------------------------------------------
def attention_forward(x, w_qkv, w_out, *, heads, dim_head):
    """x: (B, N, dim) f32.  w_qkv: (3*inner, dim).  w_out: (dim, inner)."""
    B, N, dim = x.shape
    inner = heads * dim_head
    scale = dim_head ** (-0.5)

    # to_qkv (no bias): one kernel, three outputs, fp16 cast applied inside.
    q2, k2, v2 = qkv_projection(x.reshape(B * N, dim), w_qkv, inner=inner)

    # Raw .reshape exactly as the PyTorch module (flat-order preserving -> free).
    q = q2.reshape(B, heads, N, dim_head)
    k = k2.reshape(B, heads, N, dim_head)
    v = v2.reshape(B, heads, N, dim_head)

    # Flash attention + fp16 output emulation + rearrange + to_out, all fused.
    return fused_attention(q, k, v, w_out, scale=scale)


# ----------------------------------------------------------------------------
# Pure-JAX reference (mirrors the PyTorch module) for a correctness check.
# ----------------------------------------------------------------------------
def attention_reference(x, w_qkv, w_out, *, heads, dim_head):
    B, N, dim = x.shape
    inner = heads * dim_head
    scale = dim_head ** (-0.5)
    f16 = lambda t: t.astype(jnp.float16).astype(jnp.float32)
    qkv = x.reshape(B * N, dim) @ w_qkv.T
    q, k, v = jnp.split(qkv.reshape(B, N, 3 * inner), 3, axis=-1)
    q = f16(q.reshape(B, heads, N, dim_head))
    k = f16(k.reshape(B, heads, N, dim_head))
    v = f16(v.reshape(B, heads, N, dim_head))
    s = jnp.einsum("bhqd,bhkd->bhqk", q, k) * scale
    p = jax.nn.softmax(s, axis=-1)
    o = f16(jnp.einsum("bhqk,bhkd->bhqd", p, v))
    o = jnp.transpose(o, (0, 2, 1, 3)).reshape(B, N, inner)
    return o @ w_out.T


if __name__ == "__main__":
    key = jax.random.PRNGKey(0)
    B, N, dim = 2, 8, 32
    heads, dim_head = 4, 16
    inner = heads * dim_head

    kx, kq, ko = jax.random.split(key, 3)
    x = jax.random.normal(kx, (B, N, dim), dtype=jnp.float32)
    # nn.Linear(dim, inner*3, bias=False).weight -> (3*inner, dim)
    w_qkv = jax.random.normal(kq, (3 * inner, dim), dtype=jnp.float32) * (dim ** -0.5)
    # nn.Linear(inner, dim, bias=False).weight   -> (dim, inner)
    w_out = jax.random.normal(ko, (dim, inner), dtype=jnp.float32) * (inner ** -0.5)

    fwd = jax.jit(partial(attention_forward, heads=heads, dim_head=dim_head))
    out = jax.block_until_ready(fwd(x, w_qkv, w_out))

    assert out.shape == (B, N, dim), out.shape
    assert out.dtype == jnp.float32
    assert bool(jnp.all(jnp.isfinite(out)))

    ref = attention_reference(x, w_qkv, w_out, heads=heads, dim_head=dim_head)
    assert bool(jnp.allclose(out, ref, atol=2e-2, rtol=2e-2)), (
        "max abs diff = %s" % float(jnp.max(jnp.abs(out - ref))))

    print("KERNEL_OK")
</pallas_src>

<mosaic_0001>
module attributes {stable_mosaic.version = 11 : i64} {
  func.func @_qkv_proj_kernel(%arg0: i32, %arg1: memref<16x32xf32, #tpu.memory_space<vmem>>, %arg2: memref<192x32xf32, #tpu.memory_space<vmem>>, %arg3: memref<16x64xf32, #tpu.memory_space<vmem>>, %arg4: memref<16x64xf32, #tpu.memory_space<vmem>>, %arg5: memref<16x64xf32, #tpu.memory_space<vmem>>) attributes {dimension_semantics = [#tpu.dimension_semantics<parallel>], iteration_bounds = array<i64: 1>, scalar_prefetch = 0 : i64, scratch_operands = 0 : i64, tpu.core_type = #tpu.core_type<tc>, window_params = [{transform_indices = @transform_0, window_bounds = array<i64: 16, 32>}, {pipeline_mode = #tpu.pipeline_mode<synchronous>, transform_indices = @transform_1, window_bounds = array<i64: 192, 32>}, {transform_indices = @transform_2, window_bounds = array<i64: 16, 64>}, {transform_indices = @transform_3, window_bounds = array<i64: 16, 64>}, {transform_indices = @transform_4, window_bounds = array<i64: 16, 64>}]} {
    %c0 = arith.constant 0 : index
    %c0_0 = arith.constant 0 : index
    %0 = vector.load %arg1[%c0, %c0_0] : memref<16x32xf32, #tpu.memory_space<vmem>>, vector<16x32xf32>
    %c0_1 = arith.constant 0 : index
    %c0_2 = arith.constant 0 : index
    %1 = vector.load %arg2[%c0_1, %c0_2] : memref<192x32xf32, #tpu.memory_space<vmem>>, vector<64x32xf32>
    %cst = arith.constant dense<0.000000e+00> : vector<16x64xf32>
    %2 = tpu.matmul %0, %1, %cst {dimension_numbers = #tpu.dot_dimension_numbers<[1], [1], [0], [0], [0, 0, 1, 0], [], []>} : vector<16x32xf32>, vector<64x32xf32>, vector<16x64xf32> -> vector<16x64xf32>
    %3 = tpu.bitcast %2 : vector<16x64xf32> -> vector<16x64xi32>
    %c13_i32 = arith.constant 13 : i32
    %4 = vector.broadcast %c13_i32 : i32 to vector<16x64xi32>
    %5 = arith.shrui %3, %4 : vector<16x64xi32>
    %c1_i32 = arith.constant 1 : i32
    %6 = vector.broadcast %c1_i32 : i32 to vector<16x64xi32>
    %7 = arith.andi %5, %6 : vector<16x64xi32>
    %c4095_i32 = arith.constant 4095 : i32
    %8 = vector.broadcast %c4095_i32 : i32 to vector<16x64xi32>
    %9 = arith.addi %3, %8 : vector<16x64xi32>
    %10 = arith.addi %9, %7 : vector<16x64xi32>
    %c-8192_i32 = arith.constant -8192 : i32
    %11 = vector.broadcast %c-8192_i32 : i32 to vector<16x64xi32>
    %12 = arith.andi %10, %11 : vector<16x64xi32>
    %13 = tpu.bitcast %12 : vector<16x64xi32> -> vector<16x64xf32>
    %14 = math.absf %13 : vector<16x64xf32>
    %cst_3 = arith.constant 6.553600e+04 : f32
    %15 = vector.broadcast %cst_3 : f32 to vector<16x64xf32>
    %16 = arith.cmpf oge, %14, %15 : vector<16x64xf32>
    %cst_4 = arith.constant 0.000000e+00 : f32
    %17 = vector.broadcast %cst_4 : f32 to vector<16x64xf32>
    %18 = arith.cmpf ogt, %2, %17 : vector<16x64xf32>
    %cst_5 = arith.constant 0x7F800000 : f32
    %cst_6 = arith.constant 0xFF800000 : f32
    %19 = vector.broadcast %cst_5 : f32 to vector<16x64xf32>
    %20 = vector.broadcast %cst_6 : f32 to vector<16x64xf32>
    %21 = arith.select %18, %19, %20 : vector<16x64xi1>, vector<16x64xf32>
    %22 = arith.select %16, %21, %13 : vector<16x64xi1>, vector<16x64xf32>
    %c0_7 = arith.constant 0 : index
    %c0_8 = arith.constant 0 : index
    %23 = vector.load %arg3[%c0_7, %c0_8] : memref<16x64xf32, #tpu.memory_space<vmem>>, vector<16x64xf32>
    tpu.vector_store %arg3[%c0_7, %c0_8], %22 {strides = array<i32>} : memref<16x64xf32, #tpu.memory_space<vmem>>, vector<16x64xf32>,
    %c64 = arith.constant 64 : index
    %c0_9 = arith.constant 0 : index
    %24 = vector.load %arg2[%c64, %c0_9] : memref<192x32xf32, #tpu.memory_space<vmem>>, vector<64x32xf32>
    %cst_10 = arith.constant dense<0.000000e+00> : vector<16x64xf32>
    %25 = tpu.matmul %0, %24, %cst_10 {dimension_numbers = #tpu.dot_dimension_numbers<[1], [1], [0], [0], [0, 0, 1, 0], [], []>} : vector<16x32xf32>, vector<64x32xf32>, vector<16x64xf32> -> vector<16x64xf32>
    %26 = tpu.bitcast %25 : vector<16x64xf32> -> vector<16x64xi32>
    %c13_i32_11 = arith.constant 13 : i32
    %27 = vector.broadcast %c13_i32_11 : i32 to vector<16x64xi32>
    %28 = arith.shrui %26, %27 : vector<16x64xi32>
    %c1_i32_12 = arith.constant 1 : i32
    %29 = vector.broadcast %c1_i32_12 : i32 to vector<16x64xi32>
    %30 = arith.andi %28, %29 : vector<16x64xi32>
    %c4095_i32_13 = arith.constant 4095 : i32
    %31 = vector.broadcast %c4095_i32_13 : i32 to vector<16x64xi32>
    %32 = arith.addi %26, %31 : vector<16x64xi32>
    %33 = arith.addi %32, %30 : vector<16x64xi32>
    %c-8192_i32_14 = arith.constant -8192 : i32
    %34 = vector.broadcast %c-8192_i32_14 : i32 to vector<16x64xi32>
    %35 = arith.andi %33, %34 : vector<16x64xi32>
    %36 = tpu.bitcast %35 : vector<16x64xi32> -> vector<16x64xf32>
    %37 = math.absf %36 : vector<16x64xf32>
    %cst_15 = arith.constant 6.553600e+04 : f32
    %38 = vector.broadcast %cst_15 : f32 to vector<16x64xf32>
    %39 = arith.cmpf oge, %37, %38 : vector<16x64xf32>
    %cst_16 = arith.constant 0.000000e+00 : f32
    %40 = vector.broadcast %cst_16 : f32 to vector<16x64xf32>
    %41 = arith.cmpf ogt, %25, %40 : vector<16x64xf32>
    %cst_17 = arith.constant 0x7F800000 : f32
    %cst_18 = arith.constant 0xFF800000 : f32
    %42 = vector.broadcast %cst_17 : f32 to vector<16x64xf32>
    %43 = vector.broadcast %cst_18 : f32 to vector<16x64xf32>
    %44 = arith.select %41, %42, %43 : vector<16x64xi1>, vector<16x64xf32>
    %45 = arith.select %39, %44, %36 : vector<16x64xi1>, vector<16x64xf32>
    %c0_19 = arith.constant 0 : index
    %c0_20 = arith.constant 0 : index
    %46 = vector.load %arg4[%c0_19, %c0_20] : memref<16x64xf32, #tpu.memory_space<vmem>>, vector<16x64xf32>
    tpu.vector_store %arg4[%c0_19, %c0_20], %45 {strides = array<i32>} : memref<16x64xf32, #tpu.memory_space<vmem>>, vector<16x64xf32>,
    %c128 = arith.constant 128 : index
    %c0_21 = arith.constant 0 : index
    %47 = vector.load %arg2[%c128, %c0_21] : memref<192x32xf32, #tpu.memory_space<vmem>>, vector<64x32xf32>
    %cst_22 = arith.constant dense<0.000000e+00> : vector<16x64xf32>
    %48 = tpu.matmul %0, %47, %cst_22 {dimension_numbers = #tpu.dot_dimension_numbers<[1], [1], [0], [0], [0, 0, 1, 0], [], []>} : vector<16x32xf32>, vector<64x32xf32>, vector<16x64xf32> -> vector<16x64xf32>
    %49 = tpu.bitcast %48 : vector<16x64xf32> -> vector<16x64xi32>
    %c13_i32_23 = arith.constant 13 : i32
    %50 = vector.broadcast %c13_i32_23 : i32 to vector<16x64xi32>
    %51 = arith.shrui %49, %50 : vector<16x64xi32>
    %c1_i32_24 = arith.constant 1 : i32
    %52 = vector.broadcast %c1_i32_24 : i32 to vector<16x64xi32>
    %53 = arith.andi %51, %52 : vector<16x64xi32>
    %c4095_i32_25 = arith.constant 4095 : i32
    %54 = vector.broadcast %c4095_i32_25 : i32 to vector<16x64xi32>
    %55 = arith.addi %49, %54 : vector<16x64xi32>
    %56 = arith.addi %55, %53 : vector<16x64xi32>
    %c-8192_i32_26 = arith.constant -8192 : i32
    %57 = vector.broadcast %c-8192_i32_26 : i32 to vector<16x64xi32>
    %58 = arith.andi %56, %57 : vector<16x64xi32>
    %59 = tpu.bitcast %58 : vector<16x64xi32> -> vector<16x64xf32>
    %60 = math.absf %59 : vector<16x64xf32>
    %cst_27 = arith.constant 6.553600e+04 : f32
    %61 = vector.broadcast %cst_27 : f32 to vector<16x64xf32>
    %62 = arith.cmpf oge, %60, %61 : vector<16x64xf32>
    %cst_28 = arith.constant 0.000000e+00 : f32
    %63 = vector.broadcast %cst_28 : f32 to vector<16x64xf32>
    %64 = arith.cmpf ogt, %48, %63 : vector<16x64xf32>
    %cst_29 = arith.constant 0x7F800000 : f32
    %cst_30 = arith.constant 0xFF800000 : f32
    %65 = vector.broadcast %cst_29 : f32 to vector<16x64xf32>
    %66 = vector.broadcast %cst_30 : f32 to vector<16x64xf32>
    %67 = arith.select %64, %65, %66 : vector<16x64xi1>, vector<16x64xf32>
    %68 = arith.select %62, %67, %59 : vector<16x64xi1>, vector<16x64xf32>
    %c0_31 = arith.constant 0 : index
    %c0_32 = arith.constant 0 : index
    %69 = vector.load %arg5[%c0_31, %c0_32] : memref<16x64xf32, #tpu.memory_space<vmem>>, vector<16x64xf32>
    tpu.vector_store %arg5[%c0_31, %c0_32], %68 {strides = array<i32>} : memref<16x64xf32, #tpu.memory_space<vmem>>, vector<16x64xf32>,
    return
  }
  func.func @transform_0(%arg0: i32) -> (i32, i32) {
    %c0_i32 = arith.constant 0 : i32
    %c0_i32_0 = arith.constant 0 : i32
    return %arg0, %c0_i32 : i32, i32
  }
  func.func @transform_1(%arg0: i32) -> (i32, i32) {
    %c0_i32 = arith.constant 0 : i32
    %c0_i32_0 = arith.constant 0 : i32
    %c0_i32_1 = arith.constant 0 : i32
    return %c0_i32, %c0_i32_0 : i32, i32
  }
  func.func @transform_2(%arg0: i32) -> (i32, i32) {
    %c0_i32 = arith.constant 0 : i32
    %c0_i32_0 = arith.constant 0 : i32
    return %arg0, %c0_i32 : i32, i32
  }
  func.func @transform_3(%arg0: i32) -> (i32, i32) {
    %c0_i32 = arith.constant 0 : i32
    %c0_i32_0 = arith.constant 0 : i32
    return %arg0, %c0_i32 : i32, i32
  }
  func.func @transform_4(%arg0: i32) -> (i32, i32) {
    %c0_i32 = arith.constant 0 : i32
    %c0_i32_0 = arith.constant 0 : i32
    return %arg0, %c0_i32 : i32, i32
  }
}

module attributes {stable_mosaic.version = 11 : i64} {
  func.func @_flash_attn_kernel(%arg0: i32, %arg1: i32, %arg2: i32, %arg3: memref<1x4x8x16xf32, #tpu.memory_space<vmem>>, %arg4: memref<1x4x8x16xf32, #tpu.memory_space<vmem>>, %arg5: memref<1x4x8x16xf32, #tpu.memory_space<vmem>>, %arg6: memref<32x64xf32, #tpu.memory_space<vmem>>, %arg7: memref<1x8x32xf32, #tpu.memory_space<vmem>>, %arg8: memref<4x8x1xf32, #tpu.memory_space<vmem>>, %arg9: memref<4x8x1xf32, #tpu.memory_space<vmem>>, %arg10: memref<4x8x16xf32, #tpu.memory_space<vmem>>) attributes {dimension_semantics = [#tpu.dimension_semantics<parallel>, #tpu.dimension_semantics<parallel>, #tpu.dimension_semantics<arbitrary>], iteration_bounds = array<i64: 2, 1, 1>, scalar_prefetch = 0 : i64, scratch_operands = 3 : i64, tpu.core_type = #tpu.core_type<tc>, window_params = [{transform_indices = @transform_0, window_bounds = array<i64: 1, 4, 8, 16>}, {transform_indices = @transform_1, window_bounds = array<i64: 1, 4, 8, 16>}, {transform_indices = @transform_2, window_bounds = array<i64: 1, 4, 8, 16>}, {pipeline_mode = #tpu.pipeline_mode<synchronous>, transform_indices = @transform_3, window_bounds = array<i64: 32, 64>}, {transform_indices = @transform_4, window_bounds = array<i64: 1, 8, 32>}]} {
    %c0_i32 = arith.constant 0 : i32
    %0 = arith.cmpi eq, %arg2, %c0_i32 : i32
    %1 = arith.extui %0 : i1 to i32
    %c0_i32_0 = arith.constant 0 : i32
    %2 = arith.cmpi ne, %1, %c0_i32_0 : i32
    scf.if %2 {
      %cst_36 = arith.constant 0xFF800000 : f32
      %37 = vector.broadcast %cst_36 : f32 to vector<4x8x1xf32>
      %c0_37 = arith.constant 0 : index
      %c0_38 = arith.constant 0 : index
      %c0_39 = arith.constant 0 : index
      %38 = vector.load %arg8[%c0_37, %c0_38, %c0_39] : memref<4x8x1xf32, #tpu.memory_space<vmem>>, vector<4x8x1xf32>
      tpu.vector_store %arg8[%c0_37, %c0_38, %c0_39], %37 {strides = array<i32>} : memref<4x8x1xf32, #tpu.memory_space<vmem>>, vector<4x8x1xf32>,
      %cst_40 = arith.constant 0.000000e+00 : f32
      %39 = vector.broadcast %cst_40 : f32 to vector<4x8x1xf32>
      %c0_41 = arith.constant 0 : index
      %c0_42 = arith.constant 0 : index
      %c0_43 = arith.constant 0 : index
      %40 = vector.load %arg9[%c0_41, %c0_42, %c0_43] : memref<4x8x1xf32, #tpu.memory_space<vmem>>, vector<4x8x1xf32>
      tpu.vector_store %arg9[%c0_41, %c0_42, %c0_43], %39 {strides = array<i32>} : memref<4x8x1xf32, #tpu.memory_space<vmem>>, vector<4x8x1xf32>,
      %cst_44 = arith.constant 0.000000e+00 : f32
      %41 = vector.broadcast %cst_44 : f32 to vector<4x8x16xf32>
      %c0_45 = arith.constant 0 : index
      %c0_46 = arith.constant 0 : index
      %c0_47 = arith.constant 0 : index
      %42 = vector.load %arg10[%c0_45, %c0_46, %c0_47] : memref<4x8x16xf32, #tpu.memory_space<vmem>>, vector<4x8x16xf32>
      tpu.vector_store %arg10[%c0_45, %c0_46, %c0_47], %41 {strides = array<i32>} : memref<4x8x16xf32, #tpu.memory_space<vmem>>, vector<4x8x16xf32>,
    } else {
    }
    %c0 = arith.constant 0 : index
    %c0_1 = arith.constant 0 : index
    %c0_2 = arith.constant 0 : index
    %c0_3 = arith.constant 0 : index
    %3 = vector.load %arg3[%c0, %c0_1, %c0_2, %c0_3] : memref<1x4x8x16xf32, #tpu.memory_space<vmem>>, vector<1x4x8x16xf32>
    %4 = vector.shape_cast %3 : vector<1x4x8x16xf32> to vector<4x8x16xf32>
    %cst = arith.constant 2.500000e-01 : f32
    %5 = vector.broadcast %cst : f32 to vector<4x8x16xf32>
    %6 = arith.mulf %4, %5 : vector<4x8x16xf32>
    %c0_4 = arith.constant 0 : index
    %c0_5 = arith.constant 0 : index
    %c0_6 = arith.constant 0 : index
    %c0_7 = arith.constant 0 : index
    %7 = vector.load %arg4[%c0_4, %c0_5, %c0_6, %c0_7] : memref<1x4x8x16xf32, #tpu.memory_space<vmem>>, vector<1x4x8x16xf32>
    %8 = vector.shape_cast %7 : vector<1x4x8x16xf32> to vector<4x8x16xf32>
    %c0_8 = arith.constant 0 : index
    %c0_9 = arith.constant 0 : index
    %c0_10 = arith.constant 0 : index
    %c0_11 = arith.constant 0 : index
    %9 = vector.load %arg5[%c0_8, %c0_9, %c0_10, %c0_11] : memref<1x4x8x16xf32, #tpu.memory_space<vmem>>, vector<1x4x8x16xf32>
    %10 = vector.shape_cast %9 : vector<1x4x8x16xf32> to vector<4x8x16xf32>
    "tpu.trace_start"() <{level = 10 : i32, message = "hqd,hkd->hqk"}> : () -> ()
    %cst_12 = arith.constant dense<0.000000e+00> : vector<4x8x8xf32>
    %11 = tpu.matmul %6, %8, %cst_12 {dimension_numbers = #tpu.dot_dimension_numbers<[2], [2], [1], [1], [0, 0, 0, 1, 1, 1], [0], [0]>} : vector<4x8x16xf32>, vector<4x8x16xf32>, vector<4x8x8xf32> -> vector<4x8x8xf32>
    "tpu.trace_stop"() : () -> ()
    %c0_13 = arith.constant 0 : index
    %c0_14 = arith.constant 0 : index
    %c0_15 = arith.constant 0 : index
    %12 = vector.load %arg8[%c0_13, %c0_14, %c0_15] : memref<4x8x1xf32, #tpu.memory_space<vmem>>, vector<4x8x1xf32>
    %cst_16 = arith.constant dense<0xFF800000> : vector<4x8xf32>
    %13 = vector.multi_reduction <maximumf>, %11, %cst_16 [2] : vector<4x8x8xf32> to vector<4x8xf32>
    %14 = vector.shape_cast %13 : vector<4x8xf32> to vector<4x8x1xf32>
    %15 = arith.maximumf %12, %14 : vector<4x8x1xf32>
    %16 = arith.subf %12, %15 : vector<4x8x1xf32>
    %17 = math.exp %16 : vector<4x8x1xf32>
    %18 = vector.broadcast %15 : vector<4x8x1xf32> to vector<4x8x8xf32>
    %19 = arith.subf %11, %18 : vector<4x8x8xf32>
    %20 = math.exp %19 : vector<4x8x8xf32>
    %c0_17 = arith.constant 0 : index
    %c0_18 = arith.constant 0 : index
    %c0_19 = arith.constant 0 : index
    %21 = vector.load %arg9[%c0_17, %c0_18, %c0_19] : memref<4x8x1xf32, #tpu.memory_space<vmem>>, vector<4x8x1xf32>
    %22 = arith.mulf %17, %21 : vector<4x8x1xf32>
    %cst_20 = arith.constant dense<0.000000e+00> : vector<4x8xf32>
    %23 = vector.multi_reduction <add>, %20, %cst_20 [2] : vector<4x8x8xf32> to vector<4x8xf32>
    %24 = vector.shape_cast %23 : vector<4x8xf32> to vector<4x8x1xf32>
    %25 = arith.addf %22, %24 : vector<4x8x1xf32>
    %c0_21 = arith.constant 0 : index
    %c0_22 = arith.constant 0 : index
    %c0_23 = arith.constant 0 : index
    %26 = vector.load %arg9[%c0_21, %c0_22, %c0_23] : memref<4x8x1xf32, #tpu.memory_space<vmem>>, vector<4x8x1xf32>
    tpu.vector_store %arg9[%c0_21, %c0_22, %c0_23], %25 {strides = array<i32>} : memref<4x8x1xf32, #tpu.memory_space<vmem>>, vector<4x8x1xf32>,
    %c0_24 = arith.constant 0 : index
    %c0_25 = arith.constant 0 : index
    %c0_26 = arith.constant 0 : index
    %27 = vector.load %arg10[%c0_24, %c0_25, %c0_26] : memref<4x8x16xf32, #tpu.memory_space<vmem>>, vector<4x8x16xf32>
    %28 = vector.broadcast %17 : vector<4x8x1xf32> to vector<4x8x16xf32>
    %29 = arith.mulf %28, %27 : vector<4x8x16xf32>
    "tpu.trace_start"() <{level = 10 : i32, message = "hqk,hkd->hqd"}> : () -> ()
    %cst_27 = arith.constant dense<0.000000e+00> : vector<4x8x16xf32>
    %30 = tpu.matmul %20, %10, %cst_27 {dimension_numbers = #tpu.dot_dimension_numbers<[2], [1], [1], [2], [0, 0, 0, 1, 1, 2], [0], [0]>} : vector<4x8x8xf32>, vector<4x8x16xf32>, vector<4x8x16xf32> -> vector<4x8x16xf32>
    "tpu.trace_stop"() : () -> ()
    %31 = arith.addf %29, %30 : vector<4x8x16xf32>
    %c0_28 = arith.constant 0 : index
    %c0_29 = arith.constant 0 : index
    %c0_30 = arith.constant 0 : index
    %32 = vector.load %arg10[%c0_28, %c0_29, %c0_30] : memref<4x8x16xf32, #tpu.memory_space<vmem>>, vector<4x8x16xf32>
    tpu.vector_store %arg10[%c0_28, %c0_29, %c0_30], %31 {strides = array<i32>} : memref<4x8x16xf32, #tpu.memory_space<vmem>>, vector<4x8x16xf32>,
    %c0_31 = arith.constant 0 : index
    %c0_32 = arith.constant 0 : index
    %c0_33 = arith.constant 0 : index
    %33 = vector.load %arg8[%c0_31, %c0_32, %c0_33] : memref<4x8x1xf32, #tpu.memory_space<vmem>>, vector<4x8x1xf32>
    tpu.vector_store %arg8[%c0_31, %c0_32, %c0_33], %15 {strides = array<i32>} : memref<4x8x1xf32, #tpu.memory_space<vmem>>, vector<4x8x1xf32>,
    %c0_i32_34 = arith.constant 0 : i32
    %34 = arith.cmpi eq, %arg2, %c0_i32_34 : i32
    %35 = arith.extui %34 : i1 to i32
    %c0_i32_35 = arith.constant 0 : i32
    %36 = arith.cmpi ne, %35, %c0_i32_35 : i32
    scf.if %36 {
      %c0_36 = arith.constant 0 : index
      %c0_37 = arith.constant 0 : index
      %c0_38 = arith.constant 0 : index
      %37 = vector.load %arg10[%c0_36, %c0_37, %c0_38] : memref<4x8x16xf32, #tpu.memory_space<vmem>>, vector<4x8x16xf32>
      %c0_39 = arith.constant 0 : index
      %c0_40 = arith.constant 0 : index
      %c0_41 = arith.constant 0 : index
      %38 = vector.load %arg9[%c0_39, %c0_40, %c0_41] : memref<4x8x1xf32, #tpu.memory_space<vmem>>, vector<4x8x1xf32>
      %39 = tpu.reciprocal %38 {approx = true} : vector<4x8x1xf32> -> vector<4x8x1xf32>
      %40 = vector.broadcast %39 : vector<4x8x1xf32> to vector<4x8x16xf32>
      %41 = arith.mulf %37, %40 : vector<4x8x16xf32>
      %42 = tpu.bitcast %41 : vector<4x8x16xf32> -> vector<4x8x16xi32>
      %c13_i32 = arith.constant 13 : i32
      %43 = vector.broadcast %c13_i32 : i32 to vector<4x8x16xi32>
      %44 = arith.shrui %42, %43 : vector<4x8x16xi32>
      %c1_i32 = arith.constant 1 : i32
      %45 = vector.broadcast %c1_i32 : i32 to vector<4x8x16xi32>
      %46 = arith.andi %44, %45 : vector<4x8x16xi32>
      %c4095_i32 = arith.constant 4095 : i32
      %47 = vector.broadcast %c4095_i32 : i32 to vector<4x8x16xi32>
      %48 = arith.addi %42, %47 : vector<4x8x16xi32>
      %49 = arith.addi %48, %46 : vector<4x8x16xi32>
      %c-8192_i32 = arith.constant -8192 : i32
      %50 = vector.broadcast %c-8192_i32 : i32 to vector<4x8x16xi32>
      %51 = arith.andi %49, %50 : vector<4x8x16xi32>
      %52 = tpu.bitcast %51 : vector<4x8x16xi32> -> vector<4x8x16xf32>
      %53 = math.absf %52 : vector<4x8x16xf32>
      %cst_42 = arith.constant 6.553600e+04 : f32
      %54 = vector.broadcast %cst_42 : f32 to vector<4x8x16xf32>
      %55 = arith.cmpf oge, %53, %54 : vector<4x8x16xf32>
      %cst_43 = arith.constant 0.000000e+00 : f32
      %56 = vector.broadcast %cst_43 : f32 to vector<4x8x16xf32>
      %57 = arith.cmpf ogt, %41, %56 : vector<4x8x16xf32>
      %cst_44 = arith.constant 0x7F800000 : f32
      %cst_45 = arith.constant 0xFF800000 : f32
      %58 = vector.broadcast %cst_44 : f32 to vector<4x8x16xf32>
      %59 = vector.broadcast %cst_45 : f32 to vector<4x8x16xf32>
      %60 = arith.select %57, %58, %59 : vector<4x8x16xi1>, vector<4x8x16xf32>
      %61 = arith.select %55, %60, %52 : vector<4x8x16xi1>, vector<4x8x16xf32>
      %c0_46 = arith.constant 0 : index
      %c0_47 = arith.constant 0 : index
      %62 = vector.load %arg6[%c0_46, %c0_47] : memref<32x64xf32, #tpu.memory_space<vmem>>, vector<32x64xf32>
      %cst_48 = arith.constant 0.000000e+00 : f32
      %63 = vector.broadcast %cst_48 : f32 to vector<8x32xf32>
      %64 = vector.extract_strided_slice %61 {offsets = [0, 0, 0], sizes = [1, 8, 16], strides = [1, 1, 1]} : vector<4x8x16xf32> to vector<1x8x16xf32>
      %65 = vector.shape_cast %64 : vector<1x8x16xf32> to vector<8x16xf32>
      %66 = vector.extract_strided_slice %62 {offsets = [0, 0], sizes = [32, 16], strides = [1, 1]} : vector<32x64xf32> to vector<32x16xf32>
      %cst_49 = arith.constant dense<0.000000e+00> : vector<8x32xf32>
      %67 = tpu.matmul %65, %66, %cst_49 {dimension_numbers = #tpu.dot_dimension_numbers<[1], [1], [0], [0], [0, 0, 1, 0], [], []>} : vector<8x16xf32>, vector<32x16xf32>, vector<8x32xf32> -> vector<8x32xf32>
      %68 = arith.addf %63, %67 : vector<8x32xf32>
      %69 = vector.extract_strided_slice %61 {offsets = [1, 0, 0], sizes = [1, 8, 16], strides = [1, 1, 1]} : vector<4x8x16xf32> to vector<1x8x16xf32>
      %70 = vector.shape_cast %69 : vector<1x8x16xf32> to vector<8x16xf32>
      %71 = vector.extract_strided_slice %62 {offsets = [0, 16], sizes = [32, 16], strides = [1, 1]} : vector<32x64xf32> to vector<32x16xf32>
      %cst_50 = arith.constant dense<0.000000e+00> : vector<8x32xf32>
      %72 = tpu.matmul %70, %71, %cst_50 {dimension_numbers = #tpu.dot_dimension_numbers<[1], [1], [0], [0], [0, 0, 1, 0], [], []>} : vector<8x16xf32>, vector<32x16xf32>, vector<8x32xf32> -> vector<8x32xf32>
      %73 = arith.addf %68, %72 : vector<8x32xf32>
      %74 = vector.extract_strided_slice %61 {offsets = [2, 0, 0], sizes = [1, 8, 16], strides = [1, 1, 1]} : vector<4x8x16xf32> to vector<1x8x16xf32>
      %75 = vector.shape_cast %74 : vector<1x8x16xf32> to vector<8x16xf32>
      %76 = vector.extract_strided_slice %62 {offsets = [0, 32], sizes = [32, 16], strides = [1, 1]} : vector<32x64xf32> to vector<32x16xf32>
      %cst_51 = arith.constant dense<0.000000e+00> : vector<8x32xf32>
      %77 = tpu.matmul %75, %76, %cst_51 {dimension_numbers = #tpu.dot_dimension_numbers<[1], [1], [0], [0], [0, 0, 1, 0], [], []>} : vector<8x16xf32>, vector<32x16xf32>, vector<8x32xf32> -> vector<8x32xf32>
      %78 = arith.addf %73, %77 : vector<8x32xf32>
      %79 = vector.extract_strided_slice %61 {offsets = [3, 0, 0], sizes = [1, 8, 16], strides = [1, 1, 1]} : vector<4x8x16xf32> to vector<1x8x16xf32>
      %80 = vector.shape_cast %79 : vector<1x8x16xf32> to vector<8x16xf32>
      %81 = vector.extract_strided_slice %62 {offsets = [0, 48], sizes = [32, 16], strides = [1, 1]} : vector<32x64xf32> to vector<32x16xf32>
      %cst_52 = arith.constant dense<0.000000e+00> : vector<8x32xf32>
      %82 = tpu.matmul %80, %81, %cst_52 {dimension_numbers = #tpu.dot_dimension_numbers<[1], [1], [0], [0], [0, 0, 1, 0], [], []>} : vector<8x16xf32>, vector<32x16xf32>, vector<8x32xf32> -> vector<8x32xf32>
      %83 = arith.addf %78, %82 : vector<8x32xf32>
      %c0_53 = arith.constant 0 : index
      %c0_54 = arith.constant 0 : index
      %c0_55 = arith.constant 0 : index
      %84 = vector.load %arg7[%c0_53, %c0_54, %c0_55] : memref<1x8x32xf32, #tpu.memory_space<vmem>>, vector<1x8x32xf32>
      %85 = vector.shape_cast %84 : vector<1x8x32xf32> to vector<8x32xf32>
      %86 = vector.shape_cast %83 : vector<8x32xf32> to vector<1x8x32xf32>
      tpu.vector_store %arg7[%c0_53, %c0_54, %c0_55], %86 {strides = array<i32>} : memref<1x8x32xf32, #tpu.memory_space<vmem>>, vector<1x8x32xf32>,
    } else {
    }
    return
  }
  func.func @transform_0(%arg0: i32, %arg1: i32, %arg2: i32) -> (i32, i32, i32, i32) {
    %c0_i32 = arith.constant 0 : i32
    %c0_i32_0 = arith.constant 0 : i32
    %c0_i32_1 = arith.constant 0 : i32
    return %arg0, %c0_i32, %arg1, %c0_i32_0 : i32, i32, i32, i32
  }
  func.func @transform_1(%arg0: i32, %arg1: i32, %arg2: i32) -> (i32, i32, i32, i32) {
    %c0_i32 = arith.constant 0 : i32
    %c0_i32_0 = arith.constant 0 : i32
    %c0_i32_1 = arith.constant 0 : i32
    return %arg0, %c0_i32, %arg2, %c0_i32_0 : i32, i32, i32, i32
  }
  func.func @transform_2(%arg0: i32, %arg1: i32, %arg2: i32) -> (i32, i32, i32, i32) {
    %c0_i32 = arith.constant 0 : i32
    %c0_i32_0 = arith.constant 0 : i32
    %c0_i32_1 = arith.constant 0 : i32
    return %arg0, %c0_i32, %arg2, %c0_i32_0 : i32, i32, i32, i32
  }
  func.func @transform_3(%arg0: i32, %arg1: i32, %arg2: i32) -> (i32, i32) {
    %c0_i32 = arith.constant 0 : i32
    %c0_i32_0 = arith.constant 0 : i32
    %c0_i32_1 = arith.constant 0 : i32
    return %c0_i32, %c0_i32_0 : i32, i32
  }
  func.func @transform_4(%arg0: i32, %arg1: i32, %arg2: i32) -> (i32, i32, i32) {
    %c0_i32 = arith.constant 0 : i32
    %c0_i32_0 = arith.constant 0 : i32
    return %arg0, %arg1, %c0_i32 : i32, i32, i32
  }
}

</mosaic_0001>

<llo_original>
// kernel: attention_forward.2
$region0: #{attention_forward.2}
  #allocation0 [shape = 'u32[]', space=smem, size = 0x4, offset = 0x4, fixed_abs, tag = 'smem constant byte address 0x4 - core index']
  #allocation1 [shape = 'u32[144,128]{1,0:T(1,128)}', space=vmem, size = 0x12000, scoped, tag = 'internal scratch']
  %s0 = inlined_call_operand.vmem [shape: f32[16,32], index: 0, kind: input, shape index: {}]
  %s1 = inlined_call_operand.vmem [shape: f32[192,32], index: 1, kind: input, shape index: {}]
  %s2 = inlined_call_operand.vmem [shape: f32[16,64], index: 2, kind: output, shape index: {0}]
  %s3 = inlined_call_operand.vmem [shape: f32[16,64], index: 3, kind: output, shape index: {1}]
  %s4 = inlined_call_operand.vmem [shape: f32[16,64], index: 4, kind: output, shape index: {2}]
  %5 = xla_tuple %s2, %s3, %s4
  %s6 = sld [smem:[#allocation0]]
  $region34: #{attention_forward.2} parent=0
    _
  %s8 = ssub.s32 1, %s6
  %s9 = scalar_select 0, %s8, %s6
  // Predicated region
  $region2: #{attention_forward.2} parent=0 // pred_check
    _
  $region3: #{attention_forward.2} parent=0 // pred_check_branch
    %11 = sbr.rel (0) target = $region5
  $region4: #{attention_forward.2} parent=0 // pred_region
    _
  $region5: #{attention_forward.2} parent=0 // pred_fallthru
    _
  // Predicated region
  $region6: #{attention_forward.2} parent=0 // pred_check
    _
  $region7: #{attention_forward.2} parent=0 // pred_check_branch
    %13 = sbr.rel (0) target = $region9
  $region8: #{attention_forward.2} parent=0 // pred_region
    _
  $region9: #{attention_forward.2} parent=0 // pred_fallthru
    _
  %v14 = vld [vmem:[%s0] sm:$0xff]
  %v15 = vld [vmem:[%s0 + $0x8] sm:$0xff]
  %v16 = vld [vmem:[%s1] sm:$0xff]
  %v17 = vld [vmem:[%s1 + $0x8] sm:$0xff]
  %v18 = vld [vmem:[%s1 + $0x10] sm:$0xff]
  %v19 = vld [vmem:[%s1 + $0x18] sm:$0xff]
  %v20 = vld [vmem:[%s1 + $0x20] sm:$0xff]
  %v21 = vld [vmem:[%s1 + $0x28] sm:$0xff]
  %v22 = vld [vmem:[%s1 + $0x30] sm:$0xff]
  %v23 = vld [vmem:[%s1 + $0x38] sm:$0xff]
  %vm24 = vcmask 261120
  %v26 = vsel %vm24, %v14, 0
  %v29 = vsel %vm24, %v15, 0
  %v32 = vsel %vm24, %v16, 0
  %v35 = vsel %vm24, %v17, 0
  %v38 = vsel %vm24, %v18, 0
  %v41 = vsel %vm24, %v19, 0
  %v44 = vsel %vm24, %v20, 0
  %v47 = vsel %vm24, %v21, 0
  %v50 = vsel %vm24, %v22, 0
  %v53 = vsel %vm24, %v23, 0
  %55 = vmatprep.subr.mxu0 0.0
  %56 = vmatpush1.xpose.msra.mxu0 %v32
  %57 = vmatprep.subr.mxu0 0.0
  %58 = vmatpush1.xpose.msra.mxu0 %v35
  %59 = vmatprep.subr.mxu0 0.0
  %60 = vmatpush1.xpose.msra.mxu0 %v38
  %61 = vmatprep.subr.mxu0 0.0
  %62 = vmatpush1.xpose.msra.mxu0 %v41
  %63 = vmatprep.subr.mxu0 0.0
  %64 = vmatpush1.xpose.msra.mxu0 %v44
  %65 = vmatprep.subr.mxu0 0.0
  %66 = vmatpush1.xpose.msra.mxu0 %v47
  %67 = vmatprep.subr.mxu0 0.0
  %68 = vmatpush1.xpose.msra.mxu0 %v50
  %69 = vmatprep.subr.mxu0 0.0
  %70 = vmatpush1.xpose.msra.mxu0 %v53
  %71 = vmatprep.subr.mxu0 0.0
  %72 = vmatpush1.xpose.msra.mxu0 0.0
  %73 = vmatprep.subr.mxu0 0.0
  %74 = vmatpush1.xpose.msra.mxu0 0.0
  %75 = vmatprep.subr.mxu0 0.0
  %76 = vmatpush1.xpose.msra.mxu0 0.0
  %77 = vmatprep.subr.mxu0 0.0
  %78 = vmatpush1.xpose.msra.mxu0 0.0
  %79 = vmatprep.subr.mxu0 0.0
  %80 = vmatpush1.xpose.msra.mxu0 0.0
  %81 = vmatprep.subr.mxu0 0.0
  %82 = vmatpush1.xpose.msra.mxu0 0.0
  %83 = vmatprep.subr.mxu0 0.0
  %84 = vmatpush1.xpose.msra.mxu0 0.0
  %85 = vmatprep.subr.mxu0 0.0
  %86 = vmatpush1.xpose.msra.mxu0 0.0
  %87 = vmatprep.subr.mxu0 0.0
  %88 = vmatpush1.xpose.msra.mxu0 0.0
  %89 = vmatprep.subr.mxu0 0.0
  %90 = vmatpush1.xpose.msra.mxu0 0.0
  %91 = vmatprep.subr.mxu0 0.0
  %92 = vmatpush1.xpose.msra.mxu0 0.0
  %93 = vmatprep.subr.mxu0 0.0
  %94 = vmatpush1.xpose.msra.mxu0 0.0
  %95 = vmatprep.subr.mxu0 0.0
  %96 = vmatpush1.xpose.msra.mxu0 0.0
  %97 = vmatprep.subr.mxu0 0.0
  %98 = vmatpush1.xpose.msra.mxu0 0.0
  %99 = vmatprep.subr.mxu0 0.0
  %100 = vmatpush1.xpose.msra.mxu0 0.0
  %101 = vmatprep.subr.mxu0 0.0
  %102 = vmatpush1.xpose.msra.mxu0 0.0
  %103 = vmatprep.subr.mxu0 0.0
  %104 = vmatpush1.xpose.msra.mxu0 0.0
  %105 = vmatprep.subr.mxu0 0.0
  %106 = vmatpush1.xpose.msra.mxu0 0.0
  %107 = vmatprep.subr.mxu0 0.0
  %108 = vmatpush1.xpose.msra.mxu0 0.0
  %109 = vmatprep.subr.mxu0 0.0
  %110 = vmatpush1.xpose.msra.mxu0 0.0
  %111 = vmatprep.subr.mxu0 0.0
  %112 = vmatpush1.xpose.msra.mxu0 0.0
  %113 = vmatprep.subr.mxu0 0.0
  %114 = vmatpush1.xpose.msra.mxu0 0.0
  %115 = vmatprep.subr.mxu0 0.0
  %116 = vmatpush1.xpose.msra.mxu0 0.0
  %117 = vmatprep.subr.mxu0 0.0
  %118 = vmatpush1.xpose.msra.mxu0 0.0
  %119 = vmatprep.mubr.f32.mxu0 0.0
  %120 = vmatmul.mubr.f32.gmra.mrb[0].mxu0 %v26
  %v121 = vpop.f32.mrb[0].mxu0
  %v122 = vadd.f32 0.0, %v121
  %v123 = vpop.f32.mrb[0].mxu0
  %124 = vmatprep.mubr.f32.mxu0 0.0
  %125 = vmatmul.mubr.f32.gmra.mrb[0].mxu0 %v29
  %v126 = vpop.f32.mrb[0].mxu0
  %v127 = vadd.f32 0.0, %v126
  %v128 = vpop.f32.mrb[0].mxu0
  %129 = vdwg.mxu0
  %v132 = vshrl.u32 %v122, 13
  %v133 = vshrl.u32 %v127, 13
  %v134 = vand.u32 %v132, 1
  %v135 = vand.u32 %v133, 1
  %v136 = vadd.s32 %v122, 4095
  %v137 = vadd.s32 %v127, 4095
  %v138 = vadd.s32 %v136, %v134
  %v139 = vadd.s32 %v137, %v135
  %v140 = vand.u32 %v138, 4294959104
  %v141 = vand.u32 %v139, 4294959104
  %v144 = vand.u32 2147483647, %v140
  %v145 = vand.u32 2147483647, %v141
  %vm146 = vcmp.ge.f32.partialorder %v144, 65536.0
  %vm147 = vcmp.ge.f32.partialorder %v145, 65536.0
  %vm148 = vcmp.gt.f32.partialorder %v122, 0.0
  %vm149 = vcmp.gt.f32.partialorder %v127, 0.0
  %v150 = vsel %vm148, inf, -inf
  %v151 = vsel %vm149, inf, -inf
  %v152 = vsel %vm146, %v150, %v140
  %v153 = vsel %vm147, %v151, %v141
  %vm154 = vcmask 523264
  %155 = vst.msk [vmem:[%s2] sm:$0xff] %vm154, %v152
  %156 = vst.msk [vmem:[%s2 + $0x8] sm:$0xff] %vm154, %v153
  %v157 = vld [vmem:[%s1 + $0x40] sm:$0xff]
  %v158 = vld [vmem:[%s1 + $0x48] sm:$0xff]
  %v159 = vld [vmem:[%s1 + $0x50] sm:$0xff]
  %v160 = vld [vmem:[%s1 + $0x58] sm:$0xff]
  %v161 = vld [vmem:[%s1 + $0x60] sm:$0xff]
  %v162 = vld [vmem:[%s1 + $0x68] sm:$0xff]
  %v163 = vld [vmem:[%s1 + $0x70] sm:$0xff]
  %v164 = vld [vmem:[%s1 + $0x78] sm:$0xff]
  %v166 = vsel %vm24, %v157, 0
  %v169 = vsel %vm24, %v158, 0
  %v172 = vsel %vm24, %v159, 0
  %v175 = vsel %vm24, %v160, 0
  %v178 = vsel %vm24, %v161, 0
  %v181 = vsel %vm24, %v162, 0
  %v184 = vsel %vm24, %v163, 0
  %v187 = vsel %vm24, %v164, 0
  %189 = vmatprep.subr.mxu0 0.0
  %190 = vmatpush1.xpose.msra.mxu0 %v166
  %191 = vmatprep.subr.mxu0 0.0
  %192 = vmatpush1.xpose.msra.mxu0 %v169
  %193 = vmatprep.subr.mxu0 0.0
  %194 = vmatpush1.xpose.msra.mxu0 %v172
  %195 = vmatprep.subr.mxu0 0.0
  %196 = vmatpush1.xpose.msra.mxu0 %v175
  %197 = vmatprep.subr.mxu0 0.0
  %198 = vmatpush1.xpose.msra.mxu0 %v178
  %199 = vmatprep.subr.mxu0 0.0
  %200 = vmatpush1.xpose.msra.mxu0 %v181
  %201 = vmatprep.subr.mxu0 0.0
  %202 = vmatpush1.xpose.msra.mxu0 %v184
  %203 = vmatprep.subr.mxu0 0.0
  %204 = vmatpush1.xpose.msra.mxu0 %v187
  %205 = vmatprep.subr.mxu0 0.0
  %206 = vmatpush1.xpose.msra.mxu0 0.0
  %207 = vmatprep.subr.mxu0 0.0
  %208 = vmatpush1.xpose.msra.mxu0 0.0
  %209 = vmatprep.subr.mxu0 0.0
  %210 = vmatpush1.xpose.msra.mxu0 0.0
  %211 = vmatprep.subr.mxu0 0.0
  %212 = vmatpush1.xpose.msra.mxu0 0.0
  %213 = vmatprep.subr.mxu0 0.0
  %214 = vmatpush1.xpose.msra.mxu0 0.0
  %215 = vmatprep.subr.mxu0 0.0
  %216 = vmatpush1.xpose.msra.mxu0 0.0
  %217 = vmatprep.subr.mxu0 0.0
  %218 = vmatpush1.xpose.msra.mxu0 0.0
  %219 = vmatprep.subr.mxu0 0.0
  %220 = vmatpush1.xpose.msra.mxu0 0.0
  %221 = vmatprep.subr.mxu0 0.0
  %222 = vmatpush1.xpose.msra.mxu0 0.0
  %223 = vmatprep.subr.mxu0 0.0
  %224 = vmatpush1.xpose.msra.mxu0 0.0
  %225 = vmatprep.subr.mxu0 0.0
  %226 = vmatpush1.xpose.msra.mxu0 0.0
  %227 = vmatprep.subr.mxu0 0.0
  %228 = vmatpush1.xpose.msra.mxu0 0.0
  %229 = vmatprep.subr.mxu0 0.0
  %230 = vmatpush1.xpose.msra.mxu0 0.0
  %231 = vmatprep.subr.mxu0 0.0
  %232 = vmatpush1.xpose.msra.mxu0 0.0
  %233 = vmatprep.subr.mxu0 0.0
  %234 = vmatpush1.xpose.msra.mxu0 0.0
  %235 = vmatprep.subr.mxu0 0.0
  %236 = vmatpush1.xpose.msra.mxu0 0.0
  %237 = vmatprep.subr.mxu0 0.0
  %238 = vmatpush1.xpose.msra.mxu0 0.0
  %239 = vmatprep.subr.mxu0 0.0
  %240 = vmatpush1.xpose.msra.mxu0 0.0
  %241 = vmatprep.subr.mxu0 0.0
  %242 = vmatpush1.xpose.msra.mxu0 0.0
  %243 = vmatprep.subr.mxu0 0.0
  %244 = vmatpush1.xpose.msra.mxu0 0.0
  %245 = vmatprep.subr.mxu0 0.0
  %246 = vmatpush1.xpose.msra.mxu0 0.0
  %247 = vmatprep.subr.mxu0 0.0
  %248 = vmatpush1.xpose.msra.mxu0 0.0
  %249 = vmatprep.subr.mxu0 0.0
  %250 = vmatpush1.xpose.msra.mxu0 0.0
  %251 = vmatprep.subr.mxu0 0.0
  %252 = vmatpush1.xpose.msra.mxu0 0.0
  %253 = vmatprep.mubr.f32.mxu0 0.0
  %254 = vmatmul.mubr.f32.gmra.mrb[0].mxu0 %v26
  %v255 = vpop.f32.mrb[0].mxu0
  %v256 = vadd.f32 0.0, %v255
  %v257 = vpop.f32.mrb[0].mxu0
  %258 = vmatprep.mubr.f32.mxu0 0.0
  %259 = vmatmul.mubr.f32.gmra.mrb[0].mxu0 %v29
  %v260 = vpop.f32.mrb[0].mxu0
  %v261 = vadd.f32 0.0, %v260
  %v262 = vpop.f32.mrb[0].mxu0
  %263 = vdwg.mxu0
  %v266 = vshrl.u32 %v256, 13
  %v267 = vshrl.u32 %v261, 13
  %v268 = vand.u32 %v266, 1
  %v269 = vand.u32 %v267, 1
  %v270 = vadd.s32 %v256, 4095
  %v271 = vadd.s32 %v261, 4095
  %v272 = vadd.s32 %v270, %v268
  %v273 = vadd.s32 %v271, %v269
  %v274 = vand.u32 %v272, 4294959104
  %v275 = vand.u32 %v273, 4294959104
  %v278 = vand.u32 2147483647, %v274
  %v279 = vand.u32 2147483647, %v275
  %vm280 = vcmp.ge.f32.partialorder %v278, 65536.0
  %vm281 = vcmp.ge.f32.partialorder %v279, 65536.0
  %vm282 = vcmp.gt.f32.partialorder %v256, 0.0
  %vm283 = vcmp.gt.f32.partialorder %v261, 0.0
  %v284 = vsel %vm282, inf, -inf
  %v285 = vsel %vm283, inf, -inf
  %v286 = vsel %vm280, %v284, %v274
  %v287 = vsel %vm281, %v285, %v275
  %288 = vst.msk [vmem:[%s3] sm:$0xff] %vm154, %v286
  %289 = vst.msk [vmem:[%s3 + $0x8] sm:$0xff] %vm154, %v287
  %v290 = vld [vmem:[%s1 + $0x80] sm:$0xff]
  %v291 = vld [vmem:[%s1 + $0x88] sm:$0xff]
  %v292 = vld [vmem:[%s1 + $0x90] sm:$0xff]
  %v293 = vld [vmem:[%s1 + $0x98] sm:$0xff]
  %v294 = vld [vmem:[%s1 + $0xa0] sm:$0xff]
  %v295 = vld [vmem:[%s1 + $0xa8] sm:$0xff]
  %v296 = vld [vmem:[%s1 + $0xb0] sm:$0xff]
  %v297 = vld [vmem:[%s1 + $0xb8] sm:$0xff]
  %v299 = vsel %vm24, %v290, 0
  %v302 = vsel %vm24, %v291, 0
  %v305 = vsel %vm24, %v292, 0
  %v308 = vsel %vm24, %v293, 0
  %v311 = vsel %vm24, %v294, 0
  %v314 = vsel %vm24, %v295, 0
  %v317 = vsel %vm24, %v296, 0
  %v320 = vsel %vm24, %v297, 0
  %322 = vmatprep.subr.mxu0 0.0
  %323 = vmatpush1.xpose.msra.mxu0 %v299
  %324 = vmatprep.subr.mxu0 0.0
  %325 = vmatpush1.xpose.msra.mxu0 %v302
  %326 = vmatprep.subr.mxu0 0.0
  %327 = vmatpush1.xpose.msra.mxu0 %v305
  %328 = vmatprep.subr.mxu0 0.0
  %329 = vmatpush1.xpose.msra.mxu0 %v308
  %330 = vmatprep.subr.mxu0 0.0
  %331 = vmatpush1.xpose.msra.mxu0 %v311
  %332 = vmatprep.subr.mxu0 0.0
  %333 = vmatpush1.xpose.msra.mxu0 %v314
  %334 = vmatprep.subr.mxu0 0.0
  %335 = vmatpush1.xpose.msra.mxu0 %v317
  %336 = vmatprep.subr.mxu0 0.0
  %337 = vmatpush1.xpose.msra.mxu0 %v320
  %338 = vmatprep.subr.mxu0 0.0
  %339 = vmatpush1.xpose.msra.mxu0 0.0
  %340 = vmatprep.subr.mxu0 0.0
  %341 = vmatpush1.xpose.msra.mxu0 0.0
  %342 = vmatprep.subr.mxu0 0.0
  %343 = vmatpush1.xpose.msra.mxu0 0.0
  %344 = vmatprep.subr.mxu0 0.0
  %345 = vmatpush1.xpose.msra.mxu0 0.0
  %346 = vmatprep.subr.mxu0 0.0
  %347 = vmatpush1.xpose.msra.mxu0 0.0
  %348 = vmatprep.subr.mxu0 0.0
  %349 = vmatpush1.xpose.msra.mxu0 0.0
  %350 = vmatprep.subr.mxu0 0.0
  %351 = vmatpush1.xpose.msra.mxu0 0.0
  %352 = vmatprep.subr.mxu0 0.0
  %353 = vmatpush1.xpose.msra.mxu0 0.0
  %354 = vmatprep.subr.mxu0 0.0
  %355 = vmatpush1.xpose.msra.mxu0 0.0
  %356 = vmatprep.subr.mxu0 0.0
  %357 = vmatpush1.xpose.msra.mxu0 0.0
  %358 = vmatprep.subr.mxu0 0.0
  %359 = vmatpush1.xpose.msra.mxu0 0.0
  %360 = vmatprep.subr.mxu0 0.0
  %361 = vmatpush1.xpose.msra.mxu0 0.0
  %362 = vmatprep.subr.mxu0 0.0
  %363 = vmatpush1.xpose.msra.mxu0 0.0
  %364 = vmatprep.subr.mxu0 0.0
  %365 = vmatpush1.xpose.msra.mxu0 0.0
  %366 = vmatprep.subr.mxu0 0.0
  %367 = vmatpush1.xpose.msra.mxu0 0.0
  %368 = vmatprep.subr.mxu0 0.0
  %369 = vmatpush1.xpose.msra.mxu0 0.0
  %370 = vmatprep.subr.mxu0 0.0
  %371 = vmatpush1.xpose.msra.mxu0 0.0
  %372 = vmatprep.subr.mxu0 0.0
  %373 = vmatpush1.xpose.msra.mxu0 0.0
  %374 = vmatprep.subr.mxu0 0.0
  %375 = vmatpush1.xpose.msra.mxu0 0.0
  %376 = vmatprep.subr.mxu0 0.0
  %377 = vmatpush1.xpose.msra.mxu0 0.0
  %378 = vmatprep.subr.mxu0 0.0
  %379 = vmatpush1.xpose.msra.mxu0 0.0
  %380 = vmatprep.subr.mxu0 0.0
  %381 = vmatpush1.xpose.msra.mxu0 0.0
  %382 = vmatprep.subr.mxu0 0.0
  %383 = vmatpush1.xpose.msra.mxu0 0.0
  %384 = vmatprep.subr.mxu0 0.0
  %385 = vmatpush1.xpose.msra.mxu0 0.0
  %386 = vmatprep.mubr.f32.mxu0 0.0
  %387 = vmatmul.mubr.f32.gmra.mrb[0].mxu0 %v26
  %v388 = vpop.f32.mrb[0].mxu0
  %v389 = vadd.f32 0.0, %v388
  %v390 = vpop.f32.mrb[0].mxu0
  %391 = vmatprep.mubr.f32.mxu0 0.0
  %392 = vmatmul.mubr.f32.gmra.mrb[0].mxu0 %v29
  %v393 = vpop.f32.mrb[0].mxu0
  %v394 = vadd.f32 0.0, %v393
  %v395 = vpop.f32.mrb[0].mxu0
  %396 = vdwg.mxu0
  %v399 = vshrl.u32 %v389, 13
  %v400 = vshrl.u32 %v394, 13
  %v401 = vand.u32 %v399, 1
  %v402 = vand.u32 %v400, 1
  %v403 = vadd.s32 %v389, 4095
  %v404 = vadd.s32 %v394, 4095
  %v405 = vadd.s32 %v403, %v401
  %v406 = vadd.s32 %v404, %v402
  %v407 = vand.u32 %v405, 4294959104
  %v408 = vand.u32 %v406, 4294959104
  %v411 = vand.u32 2147483647, %v407
  %v412 = vand.u32 2147483647, %v408
  %vm413 = vcmp.ge.f32.partialorder %v411, 65536.0
  %vm414 = vcmp.ge.f32.partialorder %v412, 65536.0
  %vm415 = vcmp.gt.f32.partialorder %v389, 0.0
  %vm416 = vcmp.gt.f32.partialorder %v394, 0.0
  %v417 = vsel %vm415, inf, -inf
  %v418 = vsel %vm416, inf, -inf
  %v419 = vsel %vm413, %v417, %v407
  %v420 = vsel %vm414, %v418, %v408
  %421 = vst.msk [vmem:[%s4] sm:$0xff] %vm154, %v419
  %422 = vst.msk [vmem:[%s4 + $0x8] sm:$0xff] %vm154, %v420
  // Predicated region
  $region10: #{attention_forward.2} parent=0 // pred_check
    _
  $region11: #{attention_forward.2} parent=0 // pred_check_branch
    %424 = sbr.rel (0) target = $region13
  $region12: #{attention_forward.2} parent=0 // pred_region
    _
  $region13: #{attention_forward.2} parent=0 // pred_fallthru
    _
  // Predicated region
  $region14: #{attention_forward.2} parent=0 // pred_check
    _
  $region15: #{attention_forward.2} parent=0 // pred_check_branch
    %426 = sbr.rel (0) target = $region17
  $region16: #{attention_forward.2} parent=0 // pred_region
    _
  $region17: #{attention_forward.2} parent=0 // pred_fallthru
    _
  // Predicated region
  $region18: #{attention_forward.2} parent=0 // pred_check
    _
  $region19: #{attention_forward.2} parent=0 // pred_check_branch
    %428 = sbr.rel (0) target = $region21
  $region20: #{attention_forward.2} parent=0 // pred_region
    _
  $region21: #{attention_forward.2} parent=0 // pred_fallthru
    _
  // Predicated region
  $region22: #{attention_forward.2} parent=0 // pred_check
    _
  $region23: #{attention_forward.2} parent=0 // pred_check_branch
    %430 = sbr.rel (0) target = $region25
  $region24: #{attention_forward.2} parent=0 // pred_region
    _
  $region25: #{attention_forward.2} parent=0 // pred_fallthru
    _
  // Predicated region
  $region26: #{attention_forward.2} parent=0 // pred_check
    _
  $region27: #{attention_forward.2} parent=0 // pred_check_branch
    %432 = sbr.rel (0) target = $region29
  $region28: #{attention_forward.2} parent=0 // pred_region
    _
  $region29: #{attention_forward.2} parent=0 // pred_fallthru
    _
  // Predicated region
  $region30: #{attention_forward.2} parent=0 // pred_check
    _
  $region31: #{attention_forward.2} parent=0 // pred_check_branch
    %434 = sbr.rel (0) target = $region33
  $region32: #{attention_forward.2} parent=0 // pred_region
    _
  $region33: #{attention_forward.2} parent=0 // pred_fallthru
    _

// kernel: attention_forward.3
$region0: #{attention_forward.3}
  #allocation0 [shape = 'u32[]', space=smem, size = 0x4, offset = 0x4, fixed_abs, tag = 'smem constant byte address 0x4 - core index']
  #allocation1 [shape = 'u32[144,128]{1,0:T(1,128)}', space=vmem, size = 0x12000, scoped, tag = 'internal scratch']
  #allocation2 [shape = 'f32[4,8,1]{2,1,0:T(8,128)}', space=vmem, size = 0x4000, scoped, tag = 'scratch operand']
  #allocation3 [shape = 'f32[4,8,1]{2,1,0:T(8,128)}', space=vmem, size = 0x4000, scoped, tag = 'scratch operand']
  #allocation4 [shape = 'f32[4,8,16]{2,1,0:T(8,128)}', space=vmem, size = 0x4000, scoped, tag = 'scratch operand']
  %s0 = inlined_call_operand.vmem [shape: f32[2,4,8,16], index: 0, kind: input, shape index: {}]
  %s1 = inlined_call_operand.vmem [shape: f32[2,4,8,16], index: 1, kind: input, shape index: {}]
  %s2 = inlined_call_operand.vmem [shape: f32[2,4,8,16], index: 2, kind: input, shape index: {}]
  %s3 = inlined_call_operand.vmem [shape: f32[32,64], index: 3, kind: input, shape index: {}]
  %s4 = inlined_call_operand.hbm [shape: f32[2,8,32], index: 4, kind: output, shape index: {}]
  %s5 = sld [smem:[#allocation0]]
  $region57: #{attention_forward.3} parent=0
    _
  %s7 = ssub.s32 1, %s5
  %s8 = scalar_select 0, %s7, %s5
  $region1: #{attention_forward.3} parent=0
    #allocation5 [shape = 'u8[8192]{0}', space=vmem, size = 0x2000, scoped, tag = 'output window, operand 0']
    #allocation6 [shape = 's32[2]{0}', space=sflag, size = 0x8, scoped, tag = 'scoped memory for attention_forward.3']
    %9 = vsyncpa [#allocation6], 0
    %s10 = scalar_lea.sflag [#allocation6], 1
    %11 = vsyncpa %s10, 0
    loop: start=0, step=1, limit=4
    $region2: #{attention_forward.3} parent=1 // loop_pre_header
      _
    $region3: #{attention_forward.3} parent=1 // loop_header
      %s13 = sphi 0, %s17
      %p14 = scmp.ge.s32.totalorder %s13, 4
      %s20 = sphi 0, %s39
      %s21 = sphi 0, %s35
      %s22 = sphi 0, %s31
      %s23 = sphi 0, %s20
      %s24 = sphi 0, %s21
      %s25 = sphi 0, %s22
      %s26 = sphi 0, %s23
      %s27 = sphi 0, %s24
      %s28 = sphi 0, %s25
      %s44 = sphi 0, %s46
      %s47 = sphi 0, %s44
      %s48 = sphi 0, %s47
      %s64 = sphi 0, %s48
      %s72 = sphi 0, %s74
      %s75 = sphi 0, %s72
      %s76 = sphi 0, %s75
      %s92 = sphi 0, %s76
      %s100 = sphi 0, %s102
      %s103 = sphi 0, %s100
      %s104 = sphi 0, %s103
      %s120 = sphi 0, %s104
      %s124 = sphi 0, %s124
      %s126 = sphi 0, %s124
      %s127 = sphi 0, %s126
      %s141 = sphi 0, %s127
      %s149 = sphi 0, %s151
      %s152 = sphi 0, %s149
      %s153 = sphi 0, %s152
      %s169 = sphi 0, %s153
    $region4: #{attention_forward.3} parent=1 // loop_header_branch
      %16 = sbr.rel (%p14) target = $region8
    $region5: #{attention_forward.3} parent=1 // loop_body
      %s18 = ssub.s32 %s13, 1
      %s19 = ssub.s32 %s13, 2
      %s29 = sadd.s32 1, %s22
      %p30 = scmp.ge.s32.totalorder %s29, 1
      %s31 = scalar_select %p30, 0, %s29
      %s32 = sadd.s32 1, %s21
      %s33 = scalar_select %p30, %s32, %s21
      %p34 = scmp.ge.s32.totalorder %s33, 1
      %s35 = scalar_select %p34, 0, %s33
      %s36 = sadd.s32 1, %s20
      %s37 = scalar_select %p34, %s36, %s20
      %p38 = scmp.ge.s32.totalorder %s37, 2
      %s39 = scalar_select %p38, 0, %s37
      %s40 = ssub.s32 %s20, %s39
      %s41 = ssub.s32 %s21, %s35
      %s42 = sor.u32 %s40, %s41
      %p43 = scmp.eq.s32.totalorder %s42, 0
      %s45 = sadd.s32 %s44, 1
      %s46 = scalar_select %p43, %s44, %s45
      %p49 = pneg %p43
      %p50 = scmp.eq.s32.totalorder %s13, 1
      %p51 = por %p49, %p50
      %p52 = scmp.ne.s32.totalorder %s44, %s47
      %p53 = scmp.eq.s32.totalorder %s13, 0
      %p54 = por %p52, %p53
      %p55 = scmp.ne.s32.totalorder %s44, %s47
      %p56 = scmp.eq.s32.totalorder %s18, 1
      %p57 = por %p55, %p56
      %p58 = scmp.ne.s32.totalorder %s47, %s48
      %p59 = scmp.eq.s32.totalorder %s18, 0
      %p60 = por %p58, %p59
      %p61 = scmp.ne.s32.totalorder %s47, %s48
      %p62 = scmp.eq.s32.totalorder %s19, 1
      %p63 = por %p61, %p62
      %p65 = scmp.ne.s32.totalorder %s48, %s64
      %p66 = scmp.eq.s32.totalorder %s19, 0
      %p67 = por %p65, %p66
      %s68 = ssub.s32 %s20, %s39
      %s69 = ssub.s32 %s22, %s31
      %s70 = sor.u32 %s68, %s69
      %p71 = scmp.eq.s32.totalorder %s70, 0
      %s73 = sadd.s32 %s72, 1
      %s74 = scalar_select %p71, %s72, %s73
      %p77 = pneg %p71
      %p78 = scmp.eq.s32.totalorder %s13, 1
      %p79 = por %p77, %p78
      %p80 = scmp.ne.s32.totalorder %s72, %s75
      %p81 = scmp.eq.s32.totalorder %s13, 0
      %p82 = por %p80, %p81
      %p83 = scmp.ne.s32.totalorder %s72, %s75
      %p84 = scmp.eq.s32.totalorder %s18, 1
      %p85 = por %p83, %p84
      %p86 = scmp.ne.s32.totalorder %s75, %s76
      %p87 = scmp.eq.s32.totalorder %s18, 0
      %p88 = por %p86, %p87
      %p89 = scmp.ne.s32.totalorder %s75, %s76
      %p90 = scmp.eq.s32.totalorder %s19, 1
      %p91 = por %p89, %p90
      %p93 = scmp.ne.s32.totalorder %s76, %s92
      %p94 = scmp.eq.s32.totalorder %s19, 0
      %p95 = por %p93, %p94
      %s96 = ssub.s32 %s20, %s39
      %s97 = ssub.s32 %s22, %s31
      %s98 = sor.u32 %s96, %s97
      %p99 = scmp.eq.s32.totalorder %s98, 0
      %s101 = sadd.s32 %s100, 1
      %s102 = scalar_select %p99, %s100, %s101
      %p105 = pneg %p99
      %p106 = scmp.eq.s32.totalorder %s13, 1
      %p107 = por %p105, %p106
      %p108 = scmp.ne.s32.totalorder %s100, %s103
      %p109 = scmp.eq.s32.totalorder %s13, 0
      %p110 = por %p108, %p109
      %p111 = scmp.ne.s32.totalorder %s100, %s103
      %p112 = scmp.eq.s32.totalorder %s18, 1
      %p113 = por %p111, %p112
      %p114 = scmp.ne.s32.totalorder %s103, %s104
      %p115 = scmp.eq.s32.totalorder %s18, 0
      %p116 = por %p114, %p115
      %p117 = scmp.ne.s32.totalorder %s103, %s104
      %p118 = scmp.eq.s32.totalorder %s19, 1
      %p119 = por %p117, %p118
      %p121 = scmp.ne.s32.totalorder %s104, %s120
      %p122 = scmp.eq.s32.totalorder %s19, 0
      %p123 = por %p121, %p122
      %s125 = sadd.s32 %s124, 1
      %p128 = scmp.eq.s32.totalorder %s13, 1
      %p129 = scmp.ne.s32.totalorder %s124, %s126
      %p130 = scmp.eq.s32.totalorder %s13, 0
      %p131 = por %p129, %p130
      %p132 = scmp.ne.s32.totalorder %s124, %s126
      %p133 = scmp.eq.s32.totalorder %s18, 1
      %p134 = por %p132, %p133
      %p135 = scmp.ne.s32.totalorder %s126, %s127
      %p136 = scmp.eq.s32.totalorder %s18, 0
      %p137 = por %p135, %p136
      %p138 = scmp.ne.s32.totalorder %s126, %s127
      %p139 = scmp.eq.s32.totalorder %s19, 1
      %p140 = por %p138, %p139
      %p142 = scmp.ne.s32.totalorder %s127, %s141
      %p143 = scmp.eq.s32.totalorder %s19, 0
      %p144 = por %p142, %p143
      %s145 = ssub.s32 %s20, %s39
      %s146 = ssub.s32 %s21, %s35
      %s147 = sor.u32 %s145, %s146
      %p148 = scmp.eq.s32.totalorder %s147, 0
      %s150 = sadd.s32 %s149, 1
      %s151 = scalar_select %p148, %s149, %s150
      %p154 = pneg %p148
      %p155 = scmp.eq.s32.totalorder %s13, 1
      %p156 = por %p154, %p155
      %p157 = scmp.ne.s32.totalorder %s149, %s152
      %p158 = scmp.eq.s32.totalorder %s13, 0
      %p159 = por %p157, %p158
      %p160 = scmp.ne.s32.totalorder %s149, %s152
      %p161 = scmp.eq.s32.totalorder %s18, 1
      %p162 = por %p160, %p161
      %p163 = scmp.ne.s32.totalorder %s152, %s153
      %p164 = scmp.eq.s32.totalorder %s18, 0
      %p165 = por %p163, %p164
      %p166 = scmp.ne.s32.totalorder %s152, %s153
      %p167 = scmp.eq.s32.totalorder %s19, 1
      %p168 = por %p166, %p167
      %p170 = scmp.ne.s32.totalorder %s153, %s169
      %p171 = scmp.eq.s32.totalorder %s19, 0
      %p172 = por %p170, %p171
      %p173 = scmp.le.s32.totalorder 1, %s13
      %p174 = scmp.lt.s32.totalorder %s13, 3
      %p175 = pnand %p173, %p174
      %p176 = pneg %p175
      // Predicated region
      $region9: #{attention_forward.3} parent=5 // pred_check
        _
      $region10: #{attention_forward.3} parent=5 // pred_check_branch
        %178 = sbr.rel (%p175) target = $region12
      $region11: #{attention_forward.3} parent=5 // pred_region
        %s179 = ssub.s32 %s13, 1
        // Predicated region
        $region13: #{attention_forward.3} parent=11 // pred_check
          %p180 = pneg %p137
        $region14: #{attention_forward.3} parent=11 // pred_check_branch
          %182 = sbr.rel (%p180) target = $region16
        $region15: #{attention_forward.3} parent=11 // pred_region
          _
        $region16: #{attention_forward.3} parent=11 // pred_fallthru
          _
      $region12: #{attention_forward.3} parent=5 // pred_fallthru
        _
      %p183 = scmp.lt.s32.totalorder %s13, 2
      // Predicated region
      $region17: #{attention_forward.3} parent=5 // pred_check
        %p184 = pneg %p183
      $region18: #{attention_forward.3} parent=5 // pred_check_branch
        %186 = sbr.rel (%p184) target = $region20
      $region19: #{attention_forward.3} parent=5 // pred_region
        // Predicated region
        $region21: #{attention_forward.3} parent=19 // pred_check
          %p187 = pneg %p54
        $region22: #{attention_forward.3} parent=19 // pred_check_branch
          %189 = sbr.rel (%p187) target = $region24
        $region23: #{attention_forward.3} parent=19 // pred_region
          %p190 = scmp.lt.s32.totalorder %s20, 1
          %s191 = scalar_select %p190, %s20, 1
          %p192 = scmp.lt.s32.totalorder %s21, 0
          %s193 = scalar_select %p192, %s21, 0
          %s194 = smul.addr %s191, 4
          %s195 = sadd.s32 %s193, %s194
          %s196 = smul.addr %s195, 8
          %s197 = scalar_lea.vmem %s0, %s196
        $region24: #{attention_forward.3} parent=19 // pred_fallthru
          _
        // Predicated region
        $region25: #{attention_forward.3} parent=19 // pred_check
          %p198 = pneg %p82
        $region26: #{attention_forward.3} parent=19 // pred_check_branch
          %200 = sbr.rel (%p198) target = $region28
        $region27: #{attention_forward.3} parent=19 // pred_region
          %p201 = scmp.lt.s32.totalorder %s20, 1
          %s202 = scalar_select %p201, %s20, 1
          %p203 = scmp.lt.s32.totalorder %s22, 0
          %s204 = scalar_select %p203, %s22, 0
          %s205 = smul.addr %s202, 4
          %s206 = sadd.s32 %s204, %s205
          %s207 = smul.addr %s206, 8
          %s208 = scalar_lea.vmem %s1, %s207
        $region28: #{attention_forward.3} parent=19 // pred_fallthru
          _
        // Predicated region
        $region29: #{attention_forward.3} parent=19 // pred_check
          %p209 = pneg %p110
        $region30: #{attention_forward.3} parent=19 // pred_check_branch
          %211 = sbr.rel (%p209) target = $region32
        $region31: #{attention_forward.3} parent=19 // pred_region
          %p212 = scmp.lt.s32.totalorder %s20, 1
          %s213 = scalar_select %p212, %s20, 1
          %p214 = scmp.lt.s32.totalorder %s22, 0
          %s215 = scalar_select %p214, %s22, 0
          %s216 = smul.addr %s213, 4
          %s217 = sadd.s32 %s215, %s216
          %s218 = smul.addr %s217, 8
          %s219 = scalar_lea.vmem %s2, %s218
        $region32: #{attention_forward.3} parent=19 // pred_fallthru
          _
      $region20: #{attention_forward.3} parent=5 // pred_fallthru
        _
      %p220 = scmp.le.s32.totalorder 1, %s13
      %p221 = scmp.lt.s32.totalorder %s13, 3
      %p222 = pnand %p220, %p221
      %p223 = pneg %p222
      // Predicated region
      $region33: #{attention_forward.3} parent=5 // pred_check
        _
      $region34: #{attention_forward.3} parent=5 // pred_check_branch
        %225 = sbr.rel (%p222) target = $region36
      $region35: #{attention_forward.3} parent=5 // pred_region
        %s226 = ssub.s32 %s13, 1
        %p227 = scmp.lt.s32.totalorder %s23, 1
        %s228 = scalar_select %p227, %s23, 1
        %p229 = scmp.lt.s32.totalorder %s24, 0
        %s230 = scalar_select %p229, %s24, 0
        %s231 = smul.addr %s228, 4
        %s232 = sadd.s32 %s230, %s231
        %s233 = smul.addr %s232, 8
        %s234 = scalar_lea.vmem %s0, %s233
        %p235 = pneg %p60
        %p236 = pneg %p57
        %p237 = scmp.lt.s32.totalorder %s23, 1
        %s238 = scalar_select %p237, %s23, 1
        %p239 = scmp.lt.s32.totalorder %s25, 0
        %s240 = scalar_select %p239, %s25, 0
        %s241 = smul.addr %s238, 4
        %s242 = sadd.s32 %s240, %s241
        %s243 = smul.addr %s242, 8
        %s244 = scalar_lea.vmem %s1, %s243
        %p245 = pneg %p88
        %p246 = pneg %p85
        %p247 = scmp.lt.s32.totalorder %s23, 1
        %s248 = scalar_select %p247, %s23, 1
        %p249 = scmp.lt.s32.totalorder %s25, 0
        %s250 = scalar_select %p249, %s25, 0
        %s251 = smul.addr %s248, 4
        %s252 = sadd.s32 %s250, %s251
        %s253 = smul.addr %s252, 8
        %s254 = scalar_lea.vmem %s2, %s253
        %p255 = pneg %p116
        %p256 = pneg %p113
        %p257 = pneg %p137
        %p258 = pneg %p134
        %p259 = pneg %p165
        %p260 = pneg %p162
        %s261 = sand.u32 %s152, 1
        %s262 = scalar_lea.sflag [#allocation6], %s261
        %s263 = sand.u32 %s152, 1
        %s264 = smul.addr %s263, 8
        %s265 = scalar_lea.vmem [#allocation5], %s264
        %p266 = scmp.lt.s32.totalorder %s23, 1
        %s267 = scalar_select %p266, %s23, 1
        %p268 = scmp.lt.s32.totalorder %s24, 0
        %s269 = scalar_select %p268, %s24, 0
        %s270 = smul.addr %s267, 4
        %s271 = sadd.s32 %s269, %s270
        %s272 = smul.addr %s271, 8
        %s273 = scalar_lea.vmem %s0, %s272
        %p274 = scmp.lt.s32.totalorder %s23, 1
        %s275 = scalar_select %p274, %s23, 1
        %p276 = scmp.lt.s32.totalorder %s25, 0
        %s277 = scalar_select %p276, %s25, 0
        %s278 = smul.addr %s275, 4
        %s279 = sadd.s32 %s277, %s278
        %s280 = smul.addr %s279, 8
        %s281 = scalar_lea.vmem %s1, %s280
        %p282 = scmp.lt.s32.totalorder %s23, 1
        %s283 = scalar_select %p282, %s23, 1
        %p284 = scmp.lt.s32.totalorder %s25, 0
        %s285 = scalar_select %p284, %s25, 0
        %s286 = smul.addr %s283, 4
        %s287 = sadd.s32 %s285, %s286
        %s288 = smul.addr %s287, 8
        %s289 = scalar_lea.vmem %s2, %s288
        %p290 = scmp.eq.s32.totalorder %s25, 0
        // Predicated region
        $region37: #{attention_forward.3} parent=35 // pred_check
          %p291 = pneg %p290
        $region38: #{attention_forward.3} parent=35 // pred_check_branch
          %293 = sbr.rel (%p291) target = $region40
        $region39: #{attention_forward.3} parent=35 // pred_region
          %vm294 = vcmask 7168
          %295 = vst.msk [vmem:[#allocation2] sm:$0xff] %vm294, -inf
          %296 = vst.msk [vmem:[#allocation2 + $0x8] sm:$0xff] %vm294, -inf
          %297 = vst.msk [vmem:[#allocation2 + $0x10] sm:$0xff] %vm294, -inf
          %298 = vst.msk [vmem:[#allocation2 + $0x18] sm:$0xff] %vm294, -inf
          %299 = vst.msk [vmem:[#allocation3] sm:$0xff] %vm294, 0.0
          %300 = vst.msk [vmem:[#allocation3 + $0x8] sm:$0xff] %vm294, 0.0
          %301 = vst.msk [vmem:[#allocation3 + $0x10] sm:$0xff] %vm294, 0.0
          %302 = vst.msk [vmem:[#allocation3 + $0x18] sm:$0xff] %vm294, 0.0
          %vm303 = vcmask 130048
          %304 = vst.msk [vmem:[#allocation4] sm:$0xff] %vm303, 0.0
          %305 = vst.msk [vmem:[#allocation4 + $0x8] sm:$0xff] %vm303, 0.0
          %306 = vst.msk [vmem:[#allocation4 + $0x10] sm:$0xff] %vm303, 0.0
          %307 = vst.msk [vmem:[#allocation4 + $0x18] sm:$0xff] %vm303, 0.0
        $region40: #{attention_forward.3} parent=35 // pred_fallthru
          _
        %v308 = vld [vmem:[%s273] sm:$0xff]
        %v309 = vld [vmem:[%s273 + $0x8] sm:$0xff]
        %v310 = vld [vmem:[%s273 + $0x10] sm:$0xff]
        %v311 = vld [vmem:[%s273 + $0x18] sm:$0xff]
        %v312 = vmul.f32 %v308, 0.25
        %v313 = vmul.f32 %v309, 0.25
        %v314 = vmul.f32 %v310, 0.25
        %v315 = vmul.f32 %v311, 0.25
        %v316 = vld [vmem:[%s281] sm:$0xff]
        %v317 = vld [vmem:[%s281 + $0x8] sm:$0xff]
        %v318 = vld [vmem:[%s281 + $0x10] sm:$0xff]
        %v319 = vld [vmem:[%s281 + $0x18] sm:$0xff]
        %v320 = vld [vmem:[%s289] sm:$0xff]
        %v321 = vld [vmem:[%s289 + $0x8] sm:$0xff]
        %v322 = vld [vmem:[%s289 + $0x10] sm:$0xff]
        %v323 = vld [vmem:[%s289 + $0x18] sm:$0xff]
        %vm324 = vcmask 130048
        %v326 = vsel %vm324, %v312, 0
        %v329 = vsel %vm324, %v316, 0
        %331 = vmatprep.subr.mxu0 0.0
        %332 = vmatpush1.xpose.msra.mxu0 %v329
        %333 = vmatprep.subr.mxu0 0.0
        %334 = vmatpush1.xpose.msra.mxu0 0.0
        %335 = vmatprep.subr.mxu0 0.0
        %336 = vmatpush1.xpose.msra.mxu0 0.0
        %337 = vmatprep.subr.mxu0 0.0
        %338 = vmatpush1.xpose.msra.mxu0 0.0
        %339 = vmatprep.subr.mxu0 0.0
        %340 = vmatpush1.xpose.msra.mxu0 0.0
        %341 = vmatprep.subr.mxu0 0.0
        %342 = vmatpush1.xpose.msra.mxu0 0.0
        %343 = vmatprep.subr.mxu0 0.0
        %344 = vmatpush1.xpose.msra.mxu0 0.0
        %345 = vmatprep.subr.mxu0 0.0
        %346 = vmatpush1.xpose.msra.mxu0 0.0
        %347 = vmatprep.subr.mxu0 0.0
        %348 = vmatpush1.xpose.msra.mxu0 0.0
        %349 = vmatprep.subr.mxu0 0.0
        %350 = vmatpush1.xpose.msra.mxu0 0.0
        %351 = vmatprep.subr.mxu0 0.0
        %352 = vmatpush1.xpose.msra.mxu0 0.0
        %353 = vmatprep.subr.mxu0 0.0
        %354 = vmatpush1.xpose.msra.mxu0 0.0
        %355 = vmatprep.subr.mxu0 0.0
        %356 = vmatpush1.xpose.msra.mxu0 0.0
        %357 = vmatprep.subr.mxu0 0.0
        %358 = vmatpush1.xpose.msra.mxu0 0.0
        %359 = vmatprep.subr.mxu0 0.0
        %360 = vmatpush1.xpose.msra.mxu0 0.0
        %361 = vmatprep.subr.mxu0 0.0
        %362 = vmatpush1.xpose.msra.mxu0 0.0
        %363 = vmatprep.subr.mxu0 0.0
        %364 = vmatpush1.xpose.msra.mxu0 0.0
        %365 = vmatprep.subr.mxu0 0.0
        %366 = vmatpush1.xpose.msra.mxu0 0.0
        %367 = vmatprep.subr.mxu0 0.0
        %368 = vmatpush1.xpose.msra.mxu0 0.0
        %369 = vmatprep.subr.mxu0 0.0
        %370 = vmatpush1.xpose.msra.mxu0 0.0
        %371 = vmatprep.subr.mxu0 0.0
        %372 = vmatpush1.xpose.msra.mxu0 0.0
        %373 = vmatprep.subr.mxu0 0.0
        %374 = vmatpush1.xpose.msra.mxu0 0.0
        %375 = vmatprep.subr.mxu0 0.0
        %376 = vmatpush1.xpose.msra.mxu0 0.0
        %377 = vmatprep.subr.mxu0 0.0
        %378 = vmatpush1.xpose.msra.mxu0 0.0
        %379 = vmatprep.subr.mxu0 0.0
        %380 = vmatpush1.xpose.msra.mxu0 0.0
        %381 = vmatprep.subr.mxu0 0.0
        %382 = vmatpush1.xpose.msra.mxu0 0.0
        %383 = vmatprep.subr.mxu0 0.0
        %384 = vmatpush1.xpose.msra.mxu0 0.0
        %385 = vmatprep.subr.mxu0 0.0
        %386 = vmatpush1.xpose.msra.mxu0 0.0
        %387 = vmatprep.subr.mxu0 0.0
        %388 = vmatpush1.xpose.msra.mxu0 0.0
        %389 = vmatprep.subr.mxu0 0.0
        %390 = vmatpush1.xpose.msra.mxu0 0.0
        %391 = vmatprep.subr.mxu0 0.0
        %392 = vmatpush1.xpose.msra.mxu0 0.0
        %393 = vmatprep.subr.mxu0 0.0
        %394 = vmatpush1.xpose.msra.mxu0 0.0
        %395 = vmatprep.mubr.f32.mxu0 0.0
        %396 = vmatmul.mubr.f32.gmra.mrb[0].mxu0 %v326
        %v397 = vpop.f32.mrb[0].mxu0
        %v398 = vadd.f32 0.0, %v397
        %v399 = vpop.f32.mrb[0].mxu0
        %400 = vdwg.mxu0
        %v402 = vsel %vm324, %v313, 0
        %v405 = vsel %vm324, %v317, 0
        %407 = vmatprep.subr.mxu0 0.0
        %408 = vmatpush1.xpose.msra.mxu0 %v405
        %409 = vmatprep.subr.mxu0 0.0
        %410 = vmatpush1.xpose.msra.mxu0 0.0
        %411 = vmatprep.subr.mxu0 0.0
        %412 = vmatpush1.xpose.msra.mxu0 0.0
        %413 = vmatprep.subr.mxu0 0.0
        %414 = vmatpush1.xpose.msra.mxu0 0.0
        %415 = vmatprep.subr.mxu0 0.0
        %416 = vmatpush1.xpose.msra.mxu0 0.0
        %417 = vmatprep.subr.mxu0 0.0
        %418 = vmatpush1.xpose.msra.mxu0 0.0
        %419 = vmatprep.subr.mxu0 0.0
        %420 = vmatpush1.xpose.msra.mxu0 0.0
        %421 = vmatprep.subr.mxu0 0.0
        %422 = vmatpush1.xpose.msra.mxu0 0.0
        %423 = vmatprep.subr.mxu0 0.0
        %424 = vmatpush1.xpose.msra.mxu0 0.0
        %425 = vmatprep.subr.mxu0 0.0
        %426 = vmatpush1.xpose.msra.mxu0 0.0
        %427 = vmatprep.subr.mxu0 0.0
        %428 = vmatpush1.xpose.msra.mxu0 0.0
        %429 = vmatprep.subr.mxu0 0.0
        %430 = vmatpush1.xpose.msra.mxu0 0.0
        %431 = vmatprep.subr.mxu0 0.0
        %432 = vmatpush1.xpose.msra.mxu0 0.0
        %433 = vmatprep.subr.mxu0 0.0
        %434 = vmatpush1.xpose.msra.mxu0 0.0
        %435 = vmatprep.subr.mxu0 0.0
        %436 = vmatpush1.xpose.msra.mxu0 0.0
        %437 = vmatprep.subr.mxu0 0.0
        %438 = vmatpush1.xpose.msra.mxu0 0.0
        %439 = vmatprep.subr.mxu0 0.0
        %440 = vmatpush1.xpose.msra.mxu0 0.0
        %441 = vmatprep.subr.mxu0 0.0
        %442 = vmatpush1.xpose.msra.mxu0 0.0
        %443 = vmatprep.subr.mxu0 0.0
        %444 = vmatpush1.xpose.msra.mxu0 0.0
        %445 = vmatprep.subr.mxu0 0.0
        %446 = vmatpush1.xpose.msra.mxu0 0.0
        %447 = vmatprep.subr.mxu0 0.0
        %448 = vmatpush1.xpose.msra.mxu0 0.0
        %449 = vmatprep.subr.mxu0 0.0
        %450 = vmatpush1.xpose.msra.mxu0 0.0
        %451 = vmatprep.subr.mxu0 0.0
        %452 = vmatpush1.xpose.msra.mxu0 0.0
        %453 = vmatprep.subr.mxu0 0.0
        %454 = vmatpush1.xpose.msra.mxu0 0.0
        %455 = vmatprep.subr.mxu0 0.0
        %456 = vmatpush1.xpose.msra.mxu0 0.0
        %457 = vmatprep.subr.mxu0 0.0
        %458 = vmatpush1.xpose.msra.mxu0 0.0
        %459 = vmatprep.subr.mxu0 0.0
        %460 = vmatpush1.xpose.msra.mxu0 0.0
        %461 = vmatprep.subr.mxu0 0.0
        %462 = vmatpush1.xpose.msra.mxu0 0.0
        %463 = vmatprep.subr.mxu0 0.0
        %464 = vmatpush1.xpose.msra.mxu0 0.0
        %465 = vmatprep.subr.mxu0 0.0
        %466 = vmatpush1.xpose.msra.mxu0 0.0
        %467 = vmatprep.subr.mxu0 0.0
        %468 = vmatpush1.xpose.msra.mxu0 0.0
        %469 = vmatprep.subr.mxu0 0.0
        %470 = vmatpush1.xpose.msra.mxu0 0.0
        %471 = vmatprep.mubr.f32.mxu0 0.0
        %472 = vmatmul.mubr.f32.gmra.mrb[0].mxu0 %v402
        %v473 = vpop.f32.mrb[0].mxu0
        %v474 = vadd.f32 0.0, %v473
        %v475 = vpop.f32.mrb[0].mxu0
        %476 = vdwg.mxu0
        %v478 = vsel %vm324, %v314, 0
        %v481 = vsel %vm324, %v318, 0
        %483 = vmatprep.subr.mxu0 0.0
        %484 = vmatpush1.xpose.msra.mxu0 %v481
        %485 = vmatprep.subr.mxu0 0.0
        %486 = vmatpush1.xpose.msra.mxu0 0.0
        %487 = vmatprep.subr.mxu0 0.0
        %488 = vmatpush1.xpose.msra.mxu0 0.0
        %489 = vmatprep.subr.mxu0 0.0
        %490 = vmatpush1.xpose.msra.mxu0 0.0
        %491 = vmatprep.subr.mxu0 0.0
        %492 = vmatpush1.xpose.msra.mxu0 0.0
        %493 = vmatprep.subr.mxu0 0.0
        %494 = vmatpush1.xpose.msra.mxu0 0.0
        %495 = vmatprep.subr.mxu0 0.0
        %496 = vmatpush1.xpose.msra.mxu0 0.0
        %497 = vmatprep.subr.mxu0 0.0
        %498 = vmatpush1.xpose.msra.mxu0 0.0
        %499 = vmatprep.subr.mxu0 0.0
        %500 = vmatpush1.xpose.msra.mxu0 0.0
        %501 = vmatprep.subr.mxu0 0.0
        %502 = vmatpush1.xpose.msra.mxu0 0.0
        %503 = vmatprep.subr.mxu0 0.0
        %504 = vmatpush1.xpose.msra.mxu0 0.0
        %505 = vmatprep.subr.mxu0 0.0
        %506 = vmatpush1.xpose.msra.mxu0 0.0
        %507 = vmatprep.subr.mxu0 0.0
        %508 = vmatpush1.xpose.msra.mxu0 0.0
        %509 = vmatprep.subr.mxu0 0.0
        %510 = vmatpush1.xpose.msra.mxu0 0.0
        %511 = vmatprep.subr.mxu0 0.0
        %512 = vmatpush1.xpose.msra.mxu0 0.0
        %513 = vmatprep.subr.mxu0 0.0
        %514 = vmatpush1.xpose.msra.mxu0 0.0
        %515 = vmatprep.subr.mxu0 0.0
        %516 = vmatpush1.xpose.msra.mxu0 0.0
        %517 = vmatprep.subr.mxu0 0.0
        %518 = vmatpush1.xpose.msra.mxu0 0.0
        %519 = vmatprep.subr.mxu0 0.0
        %520 = vmatpush1.xpose.msra.mxu0 0.0
        %521 = vmatprep.subr.mxu0 0.0
        %522 = vmatpush1.xpose.msra.mxu0 0.0
        %523 = vmatprep.subr.mxu0 0.0
        %524 = vmatpush1.xpose.msra.mxu0 0.0
        %525 = vmatprep.subr.mxu0 0.0
        %526 = vmatpush1.xpose.msra.mxu0 0.0
        %527 = vmatprep.subr.mxu0 0.0
        %528 = vmatpush1.xpose.msra.mxu0 0.0
        %529 = vmatprep.subr.mxu0 0.0
        %530 = vmatpush1.xpose.msra.mxu0 0.0
        %531 = vmatprep.subr.mxu0 0.0
        %532 = vmatpush1.xpose.msra.mxu0 0.0
        %533 = vmatprep.subr.mxu0 0.0
        %534 = vmatpush1.xpose.msra.mxu0 0.0
        %535 = vmatprep.subr.mxu0 0.0
        %536 = vmatpush1.xpose.msra.mxu0 0.0
        %537 = vmatprep.subr.mxu0 0.0
        %538 = vmatpush1.xpose.msra.mxu0 0.0
        %539 = vmatprep.subr.mxu0 0.0
        %540 = vmatpush1.xpose.msra.mxu0 0.0
        %541 = vmatprep.subr.mxu0 0.0
        %542 = vmatpush1.xpose.msra.mxu0 0.0
        %543 = vmatprep.subr.mxu0 0.0
        %544 = vmatpush1.xpose.msra.mxu0 0.0
        %545 = vmatprep.subr.mxu0 0.0
        %546 = vmatpush1.xpose.msra.mxu0 0.0
        %547 = vmatprep.mubr.f32.mxu0 0.0
        %548 = vmatmul.mubr.f32.gmra.mrb[0].mxu0 %v478
        %v549 = vpop.f32.mrb[0].mxu0
        %v550 = vadd.f32 0.0, %v549
        %v551 = vpop.f32.mrb[0].mxu0
        %552 = vdwg.mxu0
        %v554 = vsel %vm324, %v315, 0
        %v557 = vsel %vm324, %v319, 0
        %559 = vmatprep.subr.mxu0 0.0
        %560 = vmatpush1.xpose.msra.mxu0 %v557
        %561 = vmatprep.subr.mxu0 0.0
        %562 = vmatpush1.xpose.msra.mxu0 0.0
        %563 = vmatprep.subr.mxu0 0.0
        %564 = vmatpush1.xpose.msra.mxu0 0.0
        %565 = vmatprep.subr.mxu0 0.0
        %566 = vmatpush1.xpose.msra.mxu0 0.0
        %567 = vmatprep.subr.mxu0 0.0
        %568 = vmatpush1.xpose.msra.mxu0 0.0
        %569 = vmatprep.subr.mxu0 0.0
        %570 = vmatpush1.xpose.msra.mxu0 0.0
        %571 = vmatprep.subr.mxu0 0.0
        %572 = vmatpush1.xpose.msra.mxu0 0.0
        %573 = vmatprep.subr.mxu0 0.0
        %574 = vmatpush1.xpose.msra.mxu0 0.0
        %575 = vmatprep.subr.mxu0 0.0
        %576 = vmatpush1.xpose.msra.mxu0 0.0
        %577 = vmatprep.subr.mxu0 0.0
        %578 = vmatpush1.xpose.msra.mxu0 0.0
        %579 = vmatprep.subr.mxu0 0.0
        %580 = vmatpush1.xpose.msra.mxu0 0.0
        %581 = vmatprep.subr.mxu0 0.0
        %582 = vmatpush1.xpose.msra.mxu0 0.0
        %583 = vmatprep.subr.mxu0 0.0
        %584 = vmatpush1.xpose.msra.mxu0 0.0
        %585 = vmatprep.subr.mxu0 0.0
        %586 = vmatpush1.xpose.msra.mxu0 0.0
        %587 = vmatprep.subr.mxu0 0.0
        %588 = vmatpush1.xpose.msra.mxu0 0.0
        %589 = vmatprep.subr.mxu0 0.0
        %590 = vmatpush1.xpose.msra.mxu0 0.0
        %591 = vmatprep.subr.mxu0 0.0
        %592 = vmatpush1.xpose.msra.mxu0 0.0
        %593 = vmatprep.subr.mxu0 0.0
        %594 = vmatpush1.xpose.msra.mxu0 0.0
        %595 = vmatprep.subr.mxu0 0.0
        %596 = vmatpush1.xpose.msra.mxu0 0.0
        %597 = vmatprep.subr.mxu0 0.0
        %598 = vmatpush1.xpose.msra.mxu0 0.0
        %599 = vmatprep.subr.mxu0 0.0
        %600 = vmatpush1.xpose.msra.mxu0 0.0
        %601 = vmatprep.subr.mxu0 0.0
        %602 = vmatpush1.xpose.msra.mxu0 0.0
        %603 = vmatprep.subr.mxu0 0.0
        %604 = vmatpush1.xpose.msra.mxu0 0.0
        %605 = vmatprep.subr.mxu0 0.0
        %606 = vmatpush1.xpose.msra.mxu0 0.0
        %607 = vmatprep.subr.mxu0 0.0
        %608 = vmatpush1.xpose.msra.mxu0 0.0
        %609 = vmatprep.subr.mxu0 0.0
        %610 = vmatpush1.xpose.msra.mxu0 0.0
        %611 = vmatprep.subr.mxu0 0.0
        %612 = vmatpush1.xpose.msra.mxu0 0.0
        %613 = vmatprep.subr.mxu0 0.0
        %614 = vmatpush1.xpose.msra.mxu0 0.0
        %615 = vmatprep.subr.mxu0 0.0
        %616 = vmatpush1.xpose.msra.mxu0 0.0
        %617 = vmatprep.subr.mxu0 0.0
        %618 = vmatpush1.xpose.msra.mxu0 0.0
        %619 = vmatprep.subr.mxu0 0.0
        %620 = vmatpush1.xpose.msra.mxu0 0.0
        %621 = vmatprep.subr.mxu0 0.0
        %622 = vmatpush1.xpose.msra.mxu0 0.0
        %623 = vmatprep.mubr.f32.mxu0 0.0
        %624 = vmatmul.mubr.f32.gmra.mrb[0].mxu0 %v554
        %v625 = vpop.f32.mrb[0].mxu0
        %v626 = vadd.f32 0.0, %v625
        %v627 = vpop.f32.mrb[0].mxu0
        %628 = vdwg.mxu0
        %v629 = vld [vmem:[#allocation2] sm:$0xff]
        %v630 = vld [vmem:[#allocation2 + $0x8] sm:$0xff]
        %v631 = vld [vmem:[#allocation2 + $0x10] sm:$0xff]
        %v632 = vld [vmem:[#allocation2 + $0x18] sm:$0xff]
        %vm633 = vcmask 64512
        %v634 = vsel %vm633, %v398, -inf
        %635 = vmax.xlane.f32.xlu0 %v634
        %v636 = vpop.xlane.xlu0 %635
        %v637 = vsel %vm633, %v474, -inf
        %638 = vmax.xlane.f32.xlu0 %v637
        %v639 = vpop.xlane.xlu0 %638
        %v640 = vsel %vm633, %v550, -inf
        %641 = vmax.xlane.f32.xlu0 %v640
        %v642 = vpop.xlane.xlu0 %641
        %v643 = vsel %vm633, %v626, -inf
        %644 = vmax.xlane.f32.xlu0 %v643
        %v645 = vpop.xlane.xlu0 %644
        %v646 = vmax.f32 %v629, %v636
        %v647 = vmax.f32 %v630, %v639
        %v648 = vmax.f32 %v631, %v642
        %v649 = vmax.f32 %v632, %v645
        %v650 = vsub.f32 %v629, %v646
        %v651 = vsub.f32 %v630, %v647
        %v652 = vsub.f32 %v631, %v648
        %v653 = vsub.f32 %v632, %v649
        %v654 = vmul.f32 %v650, 1.442695
        %v655 = vpow.pop %v654
        %v656 = vmul.f32 %v651, 1.442695
        %v657 = vpow.pop %v656
        %v658 = vmul.f32 %v652, 1.442695
        %v659 = vpow.pop %v658
        %v660 = vmul.f32 %v653, 1.442695
        %v661 = vpow.pop %v660
        %663 = vset.pattern.permute.xlu0 0
        %664 = vperm.xlu0 %663, %v646
        %v665 = vpop.permute.xlu0 %664
        %668 = vset.pattern.permute.xlu0 0
        %669 = vperm.xlu0 %668, %v647
        %v670 = vpop.permute.xlu0 %669
        %673 = vset.pattern.permute.xlu0 0
        %674 = vperm.xlu0 %673, %v648
        %v675 = vpop.permute.xlu0 %674
        %678 = vset.pattern.permute.xlu0 0
        %679 = vperm.xlu0 %678, %v649
        %v680 = vpop.permute.xlu0 %679
        %v682 = vsub.f32 %v398, %v665
        %v683 = vsub.f32 %v474, %v670
        %v684 = vsub.f32 %v550, %v675
        %v685 = vsub.f32 %v626, %v680
        %v686 = vmul.f32 %v682, 1.442695
        %v687 = vpow.pop %v686
        %v688 = vmul.f32 %v683, 1.442695
        %v689 = vpow.pop %v688
        %v690 = vmul.f32 %v684, 1.442695
        %v691 = vpow.pop %v690
        %v692 = vmul.f32 %v685, 1.442695
        %v693 = vpow.pop %v692
        %v694 = vld [vmem:[#allocation3] sm:$0xff]
        %v695 = vld [vmem:[#allocation3 + $0x8] sm:$0xff]
        %v696 = vld [vmem:[#allocation3 + $0x10] sm:$0xff]
        %v697 = vld [vmem:[#allocation3 + $0x18] sm:$0xff]
        %v698 = vmul.f32 %v655, %v694
        %v699 = vmul.f32 %v657, %v695
        %v700 = vmul.f32 %v659, %v696
        %v701 = vmul.f32 %v661, %v697
        %v702 = vsel %vm633, %v687, 0.0
        %703 = vadd.xlane.f32.xlu0 %v702
        %v704 = vpop.xlane.xlu0 %703
        %v705 = vsel %vm633, %v689, 0.0
        %706 = vadd.xlane.f32.xlu0 %v705
        %v707 = vpop.xlane.xlu0 %706
        %v708 = vsel %vm633, %v691, 0.0
        %709 = vadd.xlane.f32.xlu0 %v708
        %v710 = vpop.xlane.xlu0 %709
        %v711 = vsel %vm633, %v693, 0.0
        %712 = vadd.xlane.f32.xlu0 %v711
        %v713 = vpop.xlane.xlu0 %712
        %v714 = vadd.f32 %v698, %v704
        %v715 = vadd.f32 %v699, %v707
        %v716 = vadd.f32 %v700, %v710
        %v717 = vadd.f32 %v701, %v713
        %vm718 = vcmask 7168
        %719 = vst.msk [vmem:[#allocation3] sm:$0xff] %vm718, %v714
        %720 = vst.msk [vmem:[#allocation3 + $0x8] sm:$0xff] %vm718, %v715
        %721 = vst.msk [vmem:[#allocation3 + $0x10] sm:$0xff] %vm718, %v716
        %722 = vst.msk [vmem:[#allocation3 + $0x18] sm:$0xff] %vm718, %v717
        %v723 = vld [vmem:[#allocation4] sm:$0xff]
        %v724 = vld [vmem:[#allocation4 + $0x8] sm:$0xff]
        %v725 = vld [vmem:[#allocation4 + $0x10] sm:$0xff]
        %v726 = vld [vmem:[#allocation4 + $0x18] sm:$0xff]
        %728 = vset.pattern.permute.xlu0 0
        %729 = vperm.xlu0 %728, %v655
        %v730 = vpop.permute.xlu0 %729
        %733 = vset.pattern.permute.xlu0 0
        %734 = vperm.xlu0 %733, %v657
        %v735 = vpop.permute.xlu0 %734
        %738 = vset.pattern.permute.xlu0 0
        %739 = vperm.xlu0 %738, %v659
        %v740 = vpop.permute.xlu0 %739
        %743 = vset.pattern.permute.xlu0 0
        %744 = vperm.xlu0 %743, %v661
        %v745 = vpop.permute.xlu0 %744
        %v747 = vmul.f32 %v730, %v723
        %v748 = vmul.f32 %v735, %v724
        %v749 = vmul.f32 %v740, %v725
        %v750 = vmul.f32 %v745, %v726
        %v752 = vsel %vm633, %v687, 0
        %754 = vmatprep.subr.mxu0 0.0
        %755 = vmatpush1.msra.mxu0 %v320
        %756 = vmatprep.subr.mxu0 0.0
        %757 = vmatpush1.msra.mxu0 0.0
        %758 = vmatprep.subr.mxu0 0.0
        %759 = vmatpush1.msra.mxu0 0.0
        %760 = vmatprep.subr.mxu0 0.0
        %761 = vmatpush1.msra.mxu0 0.0
        %762 = vmatprep.subr.mxu0 0.0
        %763 = vmatpush1.msra.mxu0 0.0
        %764 = vmatprep.subr.mxu0 0.0
        %765 = vmatpush1.msra.mxu0 0.0
        %766 = vmatprep.subr.mxu0 0.0
        %767 = vmatpush1.msra.mxu0 0.0
        %768 = vmatprep.subr.mxu0 0.0
        %769 = vmatpush1.msra.mxu0 0.0
        %770 = vmatprep.subr.mxu0 0.0
        %771 = vmatpush1.msra.mxu0 0.0
        %772 = vmatprep.subr.mxu0 0.0
        %773 = vmatpush1.msra.mxu0 0.0
        %774 = vmatprep.subr.mxu0 0.0
        %775 = vmatpush1.msra.mxu0 0.0
        %776 = vmatprep.subr.mxu0 0.0
        %777 = vmatpush1.msra.mxu0 0.0
        %778 = vmatprep.subr.mxu0 0.0
        %779 = vmatpush1.msra.mxu0 0.0
        %780 = vmatprep.subr.mxu0 0.0
        %781 = vmatpush1.msra.mxu0 0.0
        %782 = vmatprep.subr.mxu0 0.0
        %783 = vmatpush1.msra.mxu0 0.0
        %784 = vmatprep.subr.mxu0 0.0
        %785 = vmatpush1.msra.mxu0 0.0
        %786 = vmatprep.subr.mxu0 0.0
        %787 = vmatpush1.msra.mxu0 0.0
        %788 = vmatprep.subr.mxu0 0.0
        %789 = vmatpush1.msra.mxu0 0.0
        %790 = vmatprep.subr.mxu0 0.0
        %791 = vmatpush1.msra.mxu0 0.0
        %792 = vmatprep.subr.mxu0 0.0
        %793 = vmatpush1.msra.mxu0 0.0
        %794 = vmatprep.subr.mxu0 0.0
        %795 = vmatpush1.msra.mxu0 0.0
        %796 = vmatprep.subr.mxu0 0.0
        %797 = vmatpush1.msra.mxu0 0.0
        %798 = vmatprep.subr.mxu0 0.0
        %799 = vmatpush1.msra.mxu0 0.0
        %800 = vmatprep.subr.mxu0 0.0
        %801 = vmatpush1.msra.mxu0 0.0
        %802 = vmatprep.subr.mxu0 0.0
        %803 = vmatpush1.msra.mxu0 0.0
        %804 = vmatprep.subr.mxu0 0.0
        %805 = vmatpush1.msra.mxu0 0.0
        %806 = vmatprep.subr.mxu0 0.0
        %807 = vmatpush1.msra.mxu0 0.0
        %808 = vmatprep.subr.mxu0 0.0
        %809 = vmatpush1.msra.mxu0 0.0
        %810 = vmatprep.subr.mxu0 0.0
        %811 = vmatpush1.msra.mxu0 0.0
        %812 = vmatprep.subr.mxu0 0.0
        %813 = vmatpush1.msra.mxu0 0.0
        %814 = vmatprep.subr.mxu0 0.0
        %815 = vmatpush1.msra.mxu0 0.0
        %816 = vmatprep.subr.mxu0 0.0
        %817 = vmatpush1.msra.mxu0 0.0
        %818 = vmatprep.mubr.f32.mxu0 0.0
        %819 = vmatmul.mubr.f32.gmra.mrb[0].mxu0 %v752
        %v820 = vpop.f32.mrb[0].mxu0
        %v821 = vadd.f32 0.0, %v820
        %v822 = vpop.f32.mrb[0].mxu0
        %823 = vdwg.mxu0
        %v825 = vsel %vm633, %v689, 0
        %827 = vmatprep.subr.mxu0 0.0
        %828 = vmatpush1.msra.mxu0 %v321
        %829 = vmatprep.subr.mxu0 0.0
        %830 = vmatpush1.msra.mxu0 0.0
        %831 = vmatprep.subr.mxu0 0.0
        %832 = vmatpush1.msra.mxu0 0.0
        %833 = vmatprep.subr.mxu0 0.0
        %834 = vmatpush1.msra.mxu0 0.0
        %835 = vmatprep.subr.mxu0 0.0
        %836 = vmatpush1.msra.mxu0 0.0
        %837 = vmatprep.subr.mxu0 0.0
        %838 = vmatpush1.msra.mxu0 0.0
        %839 = vmatprep.subr.mxu0 0.0
        %840 = vmatpush1.msra.mxu0 0.0
        %841 = vmatprep.subr.mxu0 0.0
        %842 = vmatpush1.msra.mxu0 0.0
        %843 = vmatprep.subr.mxu0 0.0
        %844 = vmatpush1.msra.mxu0 0.0
        %845 = vmatprep.subr.mxu0 0.0
        %846 = vmatpush1.msra.mxu0 0.0
        %847 = vmatprep.subr.mxu0 0.0
        %848 = vmatpush1.msra.mxu0 0.0
        %849 = vmatprep.subr.mxu0 0.0
        %850 = vmatpush1.msra.mxu0 0.0
        %851 = vmatprep.subr.mxu0 0.0
        %852 = vmatpush1.msra.mxu0 0.0
        %853 = vmatprep.subr.mxu0 0.0
        %854 = vmatpush1.msra.mxu0 0.0
        %855 = vmatprep.subr.mxu0 0.0
        %856 = vmatpush1.msra.mxu0 0.0
        %857 = vmatprep.subr.mxu0 0.0
        %858 = vmatpush1.msra.mxu0 0.0
        %859 = vmatprep.subr.mxu0 0.0
        %860 = vmatpush1.msra.mxu0 0.0
        %861 = vmatprep.subr.mxu0 0.0
        %862 = vmatpush1.msra.mxu0 0.0
        %863 = vmatprep.subr.mxu0 0.0
        %864 = vmatpush1.msra.mxu0 0.0
        %865 = vmatprep.subr.mxu0 0.0
        %866 = vmatpush1.msra.mxu0 0.0
        %867 = vmatprep.subr.mxu0 0.0
        %868 = vmatpush1.msra.mxu0 0.0
        %869 = vmatprep.subr.mxu0 0.0
        %870 = vmatpush1.msra.mxu0 0.0
        %871 = vmatprep.subr.mxu0 0.0
        %872 = vmatpush1.msra.mxu0 0.0
        %873 = vmatprep.subr.mxu0 0.0
        %874 = vmatpush1.msra.mxu0 0.0
        %875 = vmatprep.subr.mxu0 0.0
        %876 = vmatpush1.msra.mxu0 0.0
        %877 = vmatprep.subr.mxu0 0.0
        %878 = vmatpush1.msra.mxu0 0.0
        %879 = vmatprep.subr.mxu0 0.0
        %880 = vmatpush1.msra.mxu0 0.0
        %881 = vmatprep.subr.mxu0 0.0
        %882 = vmatpush1.msra.mxu0 0.0
        %883 = vmatprep.subr.mxu0 0.0
        %884 = vmatpush1.msra.mxu0 0.0
        %885 = vmatprep.subr.mxu0 0.0
        %886 = vmatpush1.msra.mxu0 0.0
        %887 = vmatprep.subr.mxu0 0.0
        %888 = vmatpush1.msra.mxu0 0.0
        %889 = vmatprep.subr.mxu0 0.0
        %890 = vmatpush1.msra.mxu0 0.0
        %891 = vmatprep.mubr.f32.mxu0 0.0
        %892 = vmatmul.mubr.f32.gmra.mrb[0].mxu0 %v825
        %v893 = vpop.f32.mrb[0].mxu0
        %v894 = vadd.f32 0.0, %v893
        %v895 = vpop.f32.mrb[0].mxu0
        %896 = vdwg.mxu0
        %v898 = vsel %vm633, %v691, 0
        %900 = vmatprep.subr.mxu0 0.0
        %901 = vmatpush1.msra.mxu0 %v322
        %902 = vmatprep.subr.mxu0 0.0
        %903 = vmatpush1.msra.mxu0 0.0
        %904 = vmatprep.subr.mxu0 0.0
        %905 = vmatpush1.msra.mxu0 0.0
        %906 = vmatprep.subr.mxu0 0.0
        %907 = vmatpush1.msra.mxu0 0.0
        %908 = vmatprep.subr.mxu0 0.0
        %909 = vmatpush1.msra.mxu0 0.0
        %910 = vmatprep.subr.mxu0 0.0
        %911 = vmatpush1.msra.mxu0 0.0
        %912 = vmatprep.subr.mxu0 0.0
        %913 = vmatpush1.msra.mxu0 0.0
        %914 = vmatprep.subr.mxu0 0.0
        %915 = vmatpush1.msra.mxu0 0.0
        %916 = vmatprep.subr.mxu0 0.0
        %917 = vmatpush1.msra.mxu0 0.0
        %918 = vmatprep.subr.mxu0 0.0
        %919 = vmatpush1.msra.mxu0 0.0
        %920 = vmatprep.subr.mxu0 0.0
        %921 = vmatpush1.msra.mxu0 0.0
        %922 = vmatprep.subr.mxu0 0.0
        %923 = vmatpush1.msra.mxu0 0.0
        %924 = vmatprep.subr.mxu0 0.0
        %925 = vmatpush1.msra.mxu0 0.0
        %926 = vmatprep.subr.mxu0 0.0
        %927 = vmatpush1.msra.mxu0 0.0
        %928 = vmatprep.subr.mxu0 0.0
        %929 = vmatpush1.msra.mxu0 0.0
        %930 = vmatprep.subr.mxu0 0.0
        %931 = vmatpush1.msra.mxu0 0.0
        %932 = vmatprep.subr.mxu0 0.0
        %933 = vmatpush1.msra.mxu0 0.0
        %934 = vmatprep.subr.mxu0 0.0
        %935 = vmatpush1.msra.mxu0 0.0
        %936 = vmatprep.subr.mxu0 0.0
        %937 = vmatpush1.msra.mxu0 0.0
        %938 = vmatprep.subr.mxu0 0.0
        %939 = vmatpush1.msra.mxu0 0.0
        %940 = vmatprep.subr.mxu0 0.0
        %941 = vmatpush1.msra.mxu0 0.0
        %942 = vmatprep.subr.mxu0 0.0
        %943 = vmatpush1.msra.mxu0 0.0
        %944 = vmatprep.subr.mxu0 0.0
        %945 = vmatpush1.msra.mxu0 0.0
        %946 = vmatprep.subr.mxu0 0.0
        %947 = vmatpush1.msra.mxu0 0.0
        %948 = vmatprep.subr.mxu0 0.0
        %949 = vmatpush1.msra.mxu0 0.0
        %950 = vmatprep.subr.mxu0 0.0
        %951 = vmatpush1.msra.mxu0 0.0
        %952 = vmatprep.subr.mxu0 0.0
        %953 = vmatpush1.msra.mxu0 0.0
        %954 = vmatprep.subr.mxu0 0.0
        %955 = vmatpush1.msra.mxu0 0.0
        %956 = vmatprep.subr.mxu0 0.0
        %957 = vmatpush1.msra.mxu0 0.0
        %958 = vmatprep.subr.mxu0 0.0
        %959 = vmatpush1.msra.mxu0 0.0
        %960 = vmatprep.subr.mxu0 0.0
        %961 = vmatpush1.msra.mxu0 0.0
        %962 = vmatprep.subr.mxu0 0.0
        %963 = vmatpush1.msra.mxu0 0.0
        %964 = vmatprep.mubr.f32.mxu0 0.0
        %965 = vmatmul.mubr.f32.gmra.mrb[0].mxu0 %v898
        %v966 = vpop.f32.mrb[0].mxu0
        %v967 = vadd.f32 0.0, %v966
        %v968 = vpop.f32.mrb[0].mxu0
        %969 = vdwg.mxu0
        %v971 = vsel %vm633, %v693, 0
        %973 = vmatprep.subr.mxu0 0.0
        %974 = vmatpush1.msra.mxu0 %v323
        %975 = vmatprep.subr.mxu0 0.0
        %976 = vmatpush1.msra.mxu0 0.0
        %977 = vmatprep.subr.mxu0 0.0
        %978 = vmatpush1.msra.mxu0 0.0
        %979 = vmatprep.subr.mxu0 0.0
        %980 = vmatpush1.msra.mxu0 0.0
        %981 = vmatprep.subr.mxu0 0.0
        %982 = vmatpush1.msra.mxu0 0.0
        %983 = vmatprep.subr.mxu0 0.0
        %984 = vmatpush1.msra.mxu0 0.0
        %985 = vmatprep.subr.mxu0 0.0
        %986 = vmatpush1.msra.mxu0 0.0
        %987 = vmatprep.subr.mxu0 0.0
        %988 = vmatpush1.msra.mxu0 0.0
        %989 = vmatprep.subr.mxu0 0.0
        %990 = vmatpush1.msra.mxu0 0.0
        %991 = vmatprep.subr.mxu0 0.0
        %992 = vmatpush1.msra.mxu0 0.0
        %993 = vmatprep.subr.mxu0 0.0
        %994 = vmatpush1.msra.mxu0 0.0
        %995 = vmatprep.subr.mxu0 0.0
        %996 = vmatpush1.msra.mxu0 0.0
        %997 = vmatprep.subr.mxu0 0.0
        %998 = vmatpush1.msra.mxu0 0.0
        %999 = vmatprep.subr.mxu0 0.0
        %1000 = vmatpush1.msra.mxu0 0.0
        %1001 = vmatprep.subr.mxu0 0.0
        %1002 = vmatpush1.msra.mxu0 0.0
        %1003 = vmatprep.subr.mxu0 0.0
        %1004 = vmatpush1.msra.mxu0 0.0
        %1005 = vmatprep.subr.mxu0 0.0
        %1006 = vmatpush1.msra.mxu0 0.0
        %1007 = vmatprep.subr.mxu0 0.0
        %1008 = vmatpush1.msra.mxu0 0.0
        %1009 = vmatprep.subr.mxu0 0.0
        %1010 = vmatpush1.msra.mxu0 0.0
        %1011 = vmatprep.subr.mxu0 0.0
        %1012 = vmatpush1.msra.mxu0 0.0
        %1013 = vmatprep.subr.mxu0 0.0
        %1014 = vmatpush1.msra.mxu0 0.0
        %1015 = vmatprep.subr.mxu0 0.0
        %1016 = vmatpush1.msra.mxu0 0.0
        %1017 = vmatprep.subr.mxu0 0.0
        %1018 = vmatpush1.msra.mxu0 0.0
        %1019 = vmatprep.subr.mxu0 0.0
        %1020 = vmatpush1.msra.mxu0 0.0
        %1021 = vmatprep.subr.mxu0 0.0
        %1022 = vmatpush1.msra.mxu0 0.0
        %1023 = vmatprep.subr.mxu0 0.0
        %1024 = vmatpush1.msra.mxu0 0.0
        %1025 = vmatprep.subr.mxu0 0.0
        %1026 = vmatpush1.msra.mxu0 0.0
        %1027 = vmatprep.subr.mxu0 0.0
        %1028 = vmatpush1.msra.mxu0 0.0
        %1029 = vmatprep.subr.mxu0 0.0
        %1030 = vmatpush1.msra.mxu0 0.0
        %1031 = vmatprep.subr.mxu0 0.0
        %1032 = vmatpush1.msra.mxu0 0.0
        %1033 = vmatprep.subr.mxu0 0.0
        %1034 = vmatpush1.msra.mxu0 0.0
        %1035 = vmatprep.subr.mxu0 0.0
        %1036 = vmatpush1.msra.mxu0 0.0
        %1037 = vmatprep.mubr.f32.mxu0 0.0
        %1038 = vmatmul.mubr.f32.gmra.mrb[0].mxu0 %v971
        %v1039 = vpop.f32.mrb[0].mxu0
        %v1040 = vadd.f32 0.0, %v1039
        %v1041 = vpop.f32.mrb[0].mxu0
        %1042 = vdwg.mxu0
        %v1043 = vadd.f32 %v747, %v821
        %v1044 = vadd.f32 %v748, %v894
        %v1045 = vadd.f32 %v749, %v967
        %v1046 = vadd.f32 %v750, %v1040
        %1047 = vst.msk [vmem:[#allocation4] sm:$0xff] %vm324, %v1043
        %1048 = vst.msk [vmem:[#allocation4 + $0x8] sm:$0xff] %vm324, %v1044
        %1049 = vst.msk [vmem:[#allocation4 + $0x10] sm:$0xff] %vm324, %v1045
        %1050 = vst.msk [vmem:[#allocation4 + $0x18] sm:$0xff] %vm324, %v1046
        %1051 = vst.msk [vmem:[#allocation2] sm:$0xff] %vm718, %v646
        %1052 = vst.msk [vmem:[#allocation2 + $0x8] sm:$0xff] %vm718, %v647
        %1053 = vst.msk [vmem:[#allocation2 + $0x10] sm:$0xff] %vm718, %v648
        %1054 = vst.msk [vmem:[#allocation2 + $0x18] sm:$0xff] %vm718, %v649
        // Predicated region
        $region41: #{attention_forward.3} parent=35 // pred_check
          %p1055 = pneg %p290
        $region42: #{attention_forward.3} parent=35 // pred_check_branch
          %1057 = sbr.rel (%p1055) target = $region44
        $region43: #{attention_forward.3} parent=35 // pred_region
          %v1058 = vld [vmem:[#allocation4] sm:$0xff]
          %v1059 = vld [vmem:[#allocation4 + $0x8] sm:$0xff]
          %v1060 = vld [vmem:[#allocation4 + $0x10] sm:$0xff]
          %v1061 = vld [vmem:[#allocation4 + $0x18] sm:$0xff]
          %v1062 = vld [vmem:[#allocation3] sm:$0xff]
          %v1063 = vld [vmem:[#allocation3 + $0x8] sm:$0xff]
          %v1064 = vld [vmem:[#allocation3 + $0x10] sm:$0xff]
          %v1065 = vld [vmem:[#allocation3 + $0x18] sm:$0xff]
          %v1066 = vrcp.pop %v1062
          %v1067 = vrcp.pop %v1063
          %v1068 = vrcp.pop %v1064
          %v1069 = vrcp.pop %v1065
          %1071 = vset.pattern.permute.xlu0 0
          %1072 = vperm.xlu0 %1071, %v1066
          %v1073 = vpop.permute.xlu0 %1072
          %1076 = vset.pattern.permute.xlu0 0
          %1077 = vperm.xlu0 %1076, %v1067
          %v1078 = vpop.permute.xlu0 %1077
          %1081 = vset.pattern.permute.xlu0 0
          %1082 = vperm.xlu0 %1081, %v1068
          %v1083 = vpop.permute.xlu0 %1082
          %1086 = vset.pattern.permute.xlu0 0
          %1087 = vperm.xlu0 %1086, %v1069
          %v1088 = vpop.permute.xlu0 %1087
          %v1090 = vmul.f32 %v1058, %v1073
          %v1091 = vmul.f32 %v1059, %v1078
          %v1092 = vmul.f32 %v1060, %v1083
          %v1093 = vmul.f32 %v1061, %v1088
          %v1098 = vshrl.u32 %v1090, 13
          %v1099 = vshrl.u32 %v1091, 13
          %v1100 = vshrl.u32 %v1092, 13
          %v1101 = vshrl.u32 %v1093, 13
          %v1102 = vand.u32 %v1098, 1
          %v1103 = vand.u32 %v1099, 1
          %v1104 = vand.u32 %v1100, 1
          %v1105 = vand.u32 %v1101, 1
          %v1106 = vadd.s32 %v1090, 4095
          %v1107 = vadd.s32 %v1091, 4095
          %v1108 = vadd.s32 %v1092, 4095
          %v1109 = vadd.s32 %v1093, 4095
          %v1110 = vadd.s32 %v1106, %v1102
          %v1111 = vadd.s32 %v1107, %v1103
          %v1112 = vadd.s32 %v1108, %v1104
          %v1113 = vadd.s32 %v1109, %v1105
          %v1114 = vand.u32 %v1110, 4294959104
          %v1115 = vand.u32 %v1111, 4294959104
          %v1116 = vand.u32 %v1112, 4294959104
          %v1117 = vand.u32 %v1113, 4294959104
          %v1122 = vand.u32 2147483647, %v1114
          %v1123 = vand.u32 2147483647, %v1115
          %v1124 = vand.u32 2147483647, %v1116
          %v1125 = vand.u32 2147483647, %v1117
          %vm1126 = vcmp.ge.f32.partialorder %v1122, 65536.0
          %vm1127 = vcmp.ge.f32.partialorder %v1123, 65536.0
          %vm1128 = vcmp.ge.f32.partialorder %v1124, 65536.0
          %vm1129 = vcmp.ge.f32.partialorder %v1125, 65536.0
          %vm1130 = vcmp.gt.f32.partialorder %v1090, 0.0
          %vm1131 = vcmp.gt.f32.partialorder %v1091, 0.0
          %vm1132 = vcmp.gt.f32.partialorder %v1092, 0.0
          %vm1133 = vcmp.gt.f32.partialorder %v1093, 0.0
          %v1134 = vsel %vm1130, inf, -inf
          %v1135 = vsel %vm1131, inf, -inf
          %v1136 = vsel %vm1132, inf, -inf
          %v1137 = vsel %vm1133, inf, -inf
          %v1138 = vsel %vm1126, %v1134, %v1114
          %v1139 = vsel %vm1127, %v1135, %v1115
          %v1140 = vsel %vm1128, %v1136, %v1116
          %v1141 = vsel %vm1129, %v1137, %v1117
          %v1142 = vld [vmem:[%s3] sm:$0xff]
          %v1143 = vld [vmem:[%s3 + $0x8] sm:$0xff]
          %v1144 = vld [vmem:[%s3 + $0x10] sm:$0xff]
          %v1145 = vld [vmem:[%s3 + $0x18] sm:$0xff]
          %1150 = vrot.lane.b32.xlu0 %v1142, 112
          %v1151 = vpop.permute.xlu0 %1150
          %1152 = vrot.lane.b32.xlu0 %v1143, 112
          %v1153 = vpop.permute.xlu0 %1152
          %1154 = vrot.lane.b32.xlu0 %v1144, 112
          %v1155 = vpop.permute.xlu0 %1154
          %1156 = vrot.lane.b32.xlu0 %v1145, 112
          %v1157 = vpop.permute.xlu0 %1156
          %v1159 = vsel %vm324, %v1139, 0
          %v1161 = vsel %vm324, %v1151, 0
          %v1163 = vsel %vm324, %v1153, 0
          %v1165 = vsel %vm324, %v1155, 0
          %v1167 = vsel %vm324, %v1157, 0
          %1169 = vmatprep.subr.mxu0 0.0
          %1170 = vmatpush1.xpose.msra.mxu0 %v1161
          %1171 = vmatprep.subr.mxu0 0.0
          %1172 = vmatpush1.xpose.msra.mxu0 %v1163
          %1173 = vmatprep.subr.mxu0 0.0
          %1174 = vmatpush1.xpose.msra.mxu0 %v1165
          %1175 = vmatprep.subr.mxu0 0.0
          %1176 = vmatpush1.xpose.msra.mxu0 %v1167
          %1177 = vmatprep.subr.mxu0 0.0
          %1178 = vmatpush1.xpose.msra.mxu0 0.0
          %1179 = vmatprep.subr.mxu0 0.0
          %1180 = vmatpush1.xpose.msra.mxu0 0.0
          %1181 = vmatprep.subr.mxu0 0.0
          %1182 = vmatpush1.xpose.msra.mxu0 0.0
          %1183 = vmatprep.subr.mxu0 0.0
          %1184 = vmatpush1.xpose.msra.mxu0 0.0
          %1185 = vmatprep.subr.mxu0 0.0
          %1186 = vmatpush1.xpose.msra.mxu0 0.0
          %1187 = vmatprep.subr.mxu0 0.0
          %1188 = vmatpush1.xpose.msra.mxu0 0.0
          %1189 = vmatprep.subr.mxu0 0.0
          %1190 = vmatpush1.xpose.msra.mxu0 0.0
          %1191 = vmatprep.subr.mxu0 0.0
          %1192 = vmatpush1.xpose.msra.mxu0 0.0
          %1193 = vmatprep.subr.mxu0 0.0
          %1194 = vmatpush1.xpose.msra.mxu0 0.0
          %1195 = vmatprep.subr.mxu0 0.0
          %1196 = vmatpush1.xpose.msra.mxu0 0.0
          %1197 = vmatprep.subr.mxu0 0.0
          %1198 = vmatpush1.xpose.msra.mxu0 0.0
          %1199 = vmatprep.subr.mxu0 0.0
          %1200 = vmatpush1.xpose.msra.mxu0 0.0
          %1201 = vmatprep.subr.mxu0 0.0
          %1202 = vmatpush1.xpose.msra.mxu0 0.0
          %1203 = vmatprep.subr.mxu0 0.0
          %1204 = vmatpush1.xpose.msra.mxu0 0.0
          %1205 = vmatprep.subr.mxu0 0.0
          %1206 = vmatpush1.xpose.msra.mxu0 0.0
          %1207 = vmatprep.subr.mxu0 0.0
          %1208 = vmatpush1.xpose.msra.mxu0 0.0
          %1209 = vmatprep.subr.mxu0 0.0
          %1210 = vmatpush1.xpose.msra.mxu0 0.0
          %1211 = vmatprep.subr.mxu0 0.0
          %1212 = vmatpush1.xpose.msra.mxu0 0.0
          %1213 = vmatprep.subr.mxu0 0.0
          %1214 = vmatpush1.xpose.msra.mxu0 0.0
          %1215 = vmatprep.subr.mxu0 0.0
          %1216 = vmatpush1.xpose.msra.mxu0 0.0
          %1217 = vmatprep.subr.mxu0 0.0
          %1218 = vmatpush1.xpose.msra.mxu0 0.0
          %1219 = vmatprep.subr.mxu0 0.0
          %1220 = vmatpush1.xpose.msra.mxu0 0.0
          %1221 = vmatprep.subr.mxu0 0.0
          %1222 = vmatpush1.xpose.msra.mxu0 0.0
          %1223 = vmatprep.subr.mxu0 0.0
          %1224 = vmatpush1.xpose.msra.mxu0 0.0
          %1225 = vmatprep.subr.mxu0 0.0
          %1226 = vmatpush1.xpose.msra.mxu0 0.0
          %1227 = vmatprep.subr.mxu0 0.0
          %1228 = vmatpush1.xpose.msra.mxu0 0.0
          %1229 = vmatprep.subr.mxu0 0.0
          %1230 = vmatpush1.xpose.msra.mxu0 0.0
          %1231 = vmatprep.subr.mxu0 0.0
          %1232 = vmatpush1.xpose.msra.mxu0 0.0
          %1233 = vmatprep.mubr.f32.mxu0 0.0
          %1234 = vmatmul.mubr.f32.gmra.mrb[0].mxu0 %v1159
          %v1235 = vpop.f32.mrb[0].mxu0
          %v1236 = vadd.f32 0.0, %v1235
          %v1237 = vpop.f32.mrb[0].mxu0
          %1238 = vdwg.mxu0
          %v1240 = vsel %vm324, %v1138, 0
          %v1242 = vsel %vm324, %v1142, 0
          %v1244 = vsel %vm324, %v1143, 0
          %v1246 = vsel %vm324, %v1144, 0
          %v1248 = vsel %vm324, %v1145, 0
          %1250 = vmatprep.subr.mxu0 0.0
          %1251 = vmatpush1.xpose.msra.mxu0 %v1242
          %1252 = vmatprep.subr.mxu0 0.0
          %1253 = vmatpush1.xpose.msra.mxu0 %v1244
          %1254 = vmatprep.subr.mxu0 0.0
          %1255 = vmatpush1.xpose.msra.mxu0 %v1246
          %1256 = vmatprep.subr.mxu0 0.0
          %1257 = vmatpush1.xpose.msra.mxu0 %v1248
          %1258 = vmatprep.subr.mxu0 0.0
          %1259 = vmatpush1.xpose.msra.mxu0 0.0
          %1260 = vmatprep.subr.mxu0 0.0
          %1261 = vmatpush1.xpose.msra.mxu0 0.0
          %1262 = vmatprep.subr.mxu0 0.0
          %1263 = vmatpush1.xpose.msra.mxu0 0.0
          %1264 = vmatprep.subr.mxu0 0.0
          %1265 = vmatpush1.xpose.msra.mxu0 0.0
          %1266 = vmatprep.subr.mxu0 0.0
          %1267 = vmatpush1.xpose.msra.mxu0 0.0
          %1268 = vmatprep.subr.mxu0 0.0
          %1269 = vmatpush1.xpose.msra.mxu0 0.0
          %1270 = vmatprep.subr.mxu0 0.0
          %1271 = vmatpush1.xpose.msra.mxu0 0.0
          %1272 = vmatprep.subr.mxu0 0.0
          %1273 = vmatpush1.xpose.msra.mxu0 0.0
          %1274 = vmatprep.subr.mxu0 0.0
          %1275 = vmatpush1.xpose.msra.mxu0 0.0
          %1276 = vmatprep.subr.mxu0 0.0
          %1277 = vmatpush1.xpose.msra.mxu0 0.0
          %1278 = vmatprep.subr.mxu0 0.0
          %1279 = vmatpush1.xpose.msra.mxu0 0.0
          %1280 = vmatprep.subr.mxu0 0.0
          %1281 = vmatpush1.xpose.msra.mxu0 0.0
          %1282 = vmatprep.subr.mxu0 0.0
          %1283 = vmatpush1.xpose.msra.mxu0 0.0
          %1284 = vmatprep.subr.mxu0 0.0
          %1285 = vmatpush1.xpose.msra.mxu0 0.0
          %1286 = vmatprep.subr.mxu0 0.0
          %1287 = vmatpush1.xpose.msra.mxu0 0.0
          %1288 = vmatprep.subr.mxu0 0.0
          %1289 = vmatpush1.xpose.msra.mxu0 0.0
          %1290 = vmatprep.subr.mxu0 0.0
          %1291 = vmatpush1.xpose.msra.mxu0 0.0
          %1292 = vmatprep.subr.mxu0 0.0
          %1293 = vmatpush1.xpose.msra.mxu0 0.0
          %1294 = vmatprep.subr.mxu0 0.0
          %1295 = vmatpush1.xpose.msra.mxu0 0.0
          %1296 = vmatprep.subr.mxu0 0.0
          %1297 = vmatpush1.xpose.msra.mxu0 0.0
          %1298 = vmatprep.subr.mxu0 0.0
          %1299 = vmatpush1.xpose.msra.mxu0 0.0
          %1300 = vmatprep.subr.mxu0 0.0
          %1301 = vmatpush1.xpose.msra.mxu0 0.0
          %1302 = vmatprep.subr.mxu0 0.0
          %1303 = vmatpush1.xpose.msra.mxu0 0.0
          %1304 = vmatprep.subr.mxu0 0.0
          %1305 = vmatpush1.xpose.msra.mxu0 0.0
          %1306 = vmatprep.subr.mxu0 0.0
          %1307 = vmatpush1.xpose.msra.mxu0 0.0
          %1308 = vmatprep.subr.mxu0 0.0
          %1309 = vmatpush1.xpose.msra.mxu0 0.0
          %1310 = vmatprep.subr.mxu0 0.0
          %1311 = vmatpush1.xpose.msra.mxu0 0.0
          %1312 = vmatprep.subr.mxu0 0.0
          %1313 = vmatpush1.xpose.msra.mxu0 0.0
          %1314 = vmatprep.mubr.f32.mxu0 0.0
          %1315 = vmatmul.mubr.f32.gmra.mrb[0].mxu0 %v1240
          %v1316 = vpop.f32.mrb[0].mxu0
          %v1317 = vadd.f32 %v1236, %v1316
          %v1318 = vpop.f32.mrb[0].mxu0
          %1319 = vdwg.mxu0
          %1320 = vrot.lane.b32.xlu0 %v1142, 96
          %v1321 = vpop.permute.xlu0 %1320
          %1322 = vrot.lane.b32.xlu0 %v1143, 96
          %v1323 = vpop.permute.xlu0 %1322
          %1324 = vrot.lane.b32.xlu0 %v1144, 96
          %v1325 = vpop.permute.xlu0 %1324
          %1326 = vrot.lane.b32.xlu0 %v1145, 96
          %v1327 = vpop.permute.xlu0 %1326
          %v1329 = vsel %vm324, %v1140, 0
          %v1331 = vsel %vm324, %v1321, 0
          %v1333 = vsel %vm324, %v1323, 0
          %v1335 = vsel %vm324, %v1325, 0
          %v1337 = vsel %vm324, %v1327, 0
          %1339 = vmatprep.subr.mxu0 0.0
          %1340 = vmatpush1.xpose.msra.mxu0 %v1331
          %1341 = vmatprep.subr.mxu0 0.0
          %1342 = vmatpush1.xpose.msra.mxu0 %v1333
          %1343 = vmatprep.subr.mxu0 0.0
          %1344 = vmatpush1.xpose.msra.mxu0 %v1335
          %1345 = vmatprep.subr.mxu0 0.0
          %1346 = vmatpush1.xpose.msra.mxu0 %v1337
          %1347 = vmatprep.subr.mxu0 0.0
          %1348 = vmatpush1.xpose.msra.mxu0 0.0
          %1349 = vmatprep.subr.mxu0 0.0
          %1350 = vmatpush1.xpose.msra.mxu0 0.0
          %1351 = vmatprep.subr.mxu0 0.0
          %1352 = vmatpush1.xpose.msra.mxu0 0.0
          %1353 = vmatprep.subr.mxu0 0.0
          %1354 = vmatpush1.xpose.msra.mxu0 0.0
          %1355 = vmatprep.subr.mxu0 0.0
          %1356 = vmatpush1.xpose.msra.mxu0 0.0
          %1357 = vmatprep.subr.mxu0 0.0
          %1358 = vmatpush1.xpose.msra.mxu0 0.0
          %1359 = vmatprep.subr.mxu0 0.0
          %1360 = vmatpush1.xpose.msra.mxu0 0.0
          %1361 = vmatprep.subr.mxu0 0.0
          %1362 = vmatpush1.xpose.msra.mxu0 0.0
          %1363 = vmatprep.subr.mxu0 0.0
          %1364 = vmatpush1.xpose.msra.mxu0 0.0
          %1365 = vmatprep.subr.mxu0 0.0
          %1366 = vmatpush1.xpose.msra.mxu0 0.0
          %1367 = vmatprep.subr.mxu0 0.0
          %1368 = vmatpush1.xpose.msra.mxu0 0.0
          %1369 = vmatprep.subr.mxu0 0.0
          %1370 = vmatpush1.xpose.msra.mxu0 0.0
          %1371 = vmatprep.subr.mxu0 0.0
          %1372 = vmatpush1.xpose.msra.mxu0 0.0
          %1373 = vmatprep.subr.mxu0 0.0
          %1374 = vmatpush1.xpose.msra.mxu0 0.0
          %1375 = vmatprep.subr.mxu0 0.0
          %1376 = vmatpush1.xpose.msra.mxu0 0.0
          %1377 = vmatprep.subr.mxu0 0.0
          %1378 = vmatpush1.xpose.msra.mxu0 0.0
          %1379 = vmatprep.subr.mxu0 0.0
          %1380 = vmatpush1.xpose.msra.mxu0 0.0
          %1381 = vmatprep.subr.mxu0 0.0
          %1382 = vmatpush1.xpose.msra.mxu0 0.0
          %1383 = vmatprep.subr.mxu0 0.0
          %1384 = vmatpush1.xpose.msra.mxu0 0.0
          %1385 = vmatprep.subr.mxu0 0.0
          %1386 = vmatpush1.xpose.msra.mxu0 0.0
          %1387 = vmatprep.subr.mxu0 0.0
          %1388 = vmatpush1.xpose.msra.mxu0 0.0
          %1389 = vmatprep.subr.mxu0 0.0
          %1390 = vmatpush1.xpose.msra.mxu0 0.0
          %1391 = vmatprep.subr.mxu0 0.0
          %1392 = vmatpush1.xpose.msra.mxu0 0.0
          %1393 = vmatprep.subr.mxu0 0.0
          %1394 = vmatpush1.xpose.msra.mxu0 0.0
          %1395 = vmatprep.subr.mxu0 0.0
          %1396 = vmatpush1.xpose.msra.mxu0 0.0
          %1397 = vmatprep.subr.mxu0 0.0
          %1398 = vmatpush1.xpose.msra.mxu0 0.0
          %1399 = vmatprep.subr.mxu0 0.0
          %1400 = vmatpush1.xpose.msra.mxu0 0.0
          %1401 = vmatprep.subr.mxu0 0.0
          %1402 = vmatpush1.xpose.msra.mxu0 0.0
          %1403 = vmatprep.mubr.f32.mxu0 0.0
          %1404 = vmatmul.mubr.f32.gmra.mrb[0].mxu0 %v1329
          %v1405 = vpop.f32.mrb[0].mxu0
          %v1406 = vadd.f32 0.0, %v1405
          %v1407 = vpop.f32.mrb[0].mxu0
          %1408 = vdwg.mxu0
          %v1409 = vadd.f32 %v1317, %v1406
          %1410 = vrot.lane.b32.xlu0 %v1142, 80
          %v1411 = vpop.permute.xlu0 %1410
          %1412 = vrot.lane.b32.xlu0 %v1143, 80
          %v1413 = vpop.permute.xlu0 %1412
          %1414 = vrot.lane.b32.xlu0 %v1144, 80
          %v1415 = vpop.permute.xlu0 %1414
          %1416 = vrot.lane.b32.xlu0 %v1145, 80
          %v1417 = vpop.permute.xlu0 %1416
          %v1419 = vsel %vm324, %v1141, 0
          %v1421 = vsel %vm324, %v1411, 0
          %v1423 = vsel %vm324, %v1413, 0
          %v1425 = vsel %vm324, %v1415, 0
          %v1427 = vsel %vm324, %v1417, 0
          %1429 = vmatprep.subr.mxu0 0.0
          %1430 = vmatpush1.xpose.msra.mxu0 %v1421
          %1431 = vmatprep.subr.mxu0 0.0
          %1432 = vmatpush1.xpose.msra.mxu0 %v1423
          %1433 = vmatprep.subr.mxu0 0.0
          %1434 = vmatpush1.xpose.msra.mxu0 %v1425
          %1435 = vmatprep.subr.mxu0 0.0
          %1436 = vmatpush1.xpose.msra.mxu0 %v1427
          %1437 = vmatprep.subr.mxu0 0.0
          %1438 = vmatpush1.xpose.msra.mxu0 0.0
          %1439 = vmatprep.subr.mxu0 0.0
          %1440 = vmatpush1.xpose.msra.mxu0 0.0
          %1441 = vmatprep.subr.mxu0 0.0
          %1442 = vmatpush1.xpose.msra.mxu0 0.0
          %1443 = vmatprep.subr.mxu0 0.0
          %1444 = vmatpush1.xpose.msra.mxu0 0.0
          %1445 = vmatprep.subr.mxu0 0.0
          %1446 = vmatpush1.xpose.msra.mxu0 0.0
          %1447 = vmatprep.subr.mxu0 0.0
          %1448 = vmatpush1.xpose.msra.mxu0 0.0
          %1449 = vmatprep.subr.mxu0 0.0
          %1450 = vmatpush1.xpose.msra.mxu0 0.0
          %1451 = vmatprep.subr.mxu0 0.0
          %1452 = vmatpush1.xpose.msra.mxu0 0.0
          %1453 = vmatprep.subr.mxu0 0.0
          %1454 = vmatpush1.xpose.msra.mxu0 0.0
          %1455 = vmatprep.subr.mxu0 0.0
          %1456 = vmatpush1.xpose.msra.mxu0 0.0
          %1457 = vmatprep.subr.mxu0 0.0
          %1458 = vmatpush1.xpose.msra.mxu0 0.0
          %1459 = vmatprep.subr.mxu0 0.0
          %1460 = vmatpush1.xpose.msra.mxu0 0.0
          %1461 = vmatprep.subr.mxu0 0.0
          %1462 = vmatpush1.xpose.msra.mxu0 0.0
          %1463 = vmatprep.subr.mxu0 0.0
          %1464 = vmatpush1.xpose.msra.mxu0 0.0
          %1465 = vmatprep.subr.mxu0 0.0
          %1466 = vmatpush1.xpose.msra.mxu0 0.0
          %1467 = vmatprep.subr.mxu0 0.0
          %1468 = vmatpush1.xpose.msra.mxu0 0.0
          %1469 = vmatprep.subr.mxu0 0.0
          %1470 = vmatpush1.xpose.msra.mxu0 0.0
          %1471 = vmatprep.subr.mxu0 0.0
          %1472 = vmatpush1.xpose.msra.mxu0 0.0
          %1473 = vmatprep.subr.mxu0 0.0
          %1474 = vmatpush1.xpose.msra.mxu0 0.0
          %1475 = vmatprep.subr.mxu0 0.0
          %1476 = vmatpush1.xpose.msra.mxu0 0.0
          %1477 = vmatprep.subr.mxu0 0.0
          %1478 = vmatpush1.xpose.msra.mxu0 0.0
          %1479 = vmatprep.subr.mxu0 0.0
          %1480 = vmatpush1.xpose.msra.mxu0 0.0
          %1481 = vmatprep.subr.mxu0 0.0
          %1482 = vmatpush1.xpose.msra.mxu0 0.0
          %1483 = vmatprep.subr.mxu0 0.0
          %1484 = vmatpush1.xpose.msra.mxu0 0.0
          %1485 = vmatprep.subr.mxu0 0.0
          %1486 = vmatpush1.xpose.msra.mxu0 0.0
          %1487 = vmatprep.subr.mxu0 0.0
          %1488 = vmatpush1.xpose.msra.mxu0 0.0
          %1489 = vmatprep.subr.mxu0 0.0
          %1490 = vmatpush1.xpose.msra.mxu0 0.0
          %1491 = vmatprep.subr.mxu0 0.0
          %1492 = vmatpush1.xpose.msra.mxu0 0.0
          %1493 = vmatprep.mubr.f32.mxu0 0.0
          %1494 = vmatmul.mubr.f32.gmra.mrb[0].mxu0 %v1419
          %v1495 = vpop.f32.mrb[0].mxu0
          %v1496 = vadd.f32 0.0, %v1495
          %v1497 = vpop.f32.mrb[0].mxu0
          %1498 = vdwg.mxu0
          %v1499 = vadd.f32 %v1409, %v1496
          %vm1500 = vcmask 261120
          %1501 = vst.msk [vmem:[%s265] sm:$0xff] %vm1500, %v1499
        $region44: #{attention_forward.3} parent=35 // pred_fallthru
          _
        %s1502 = sand.u32 %s152, 1
        %s1503 = scalar_lea.sflag [#allocation6], %s1502
        %s1504 = sand.u32 %s152, 1
        %s1505 = smul.addr %s1504, 8
        %s1506 = scalar_lea.vmem [#allocation5], %s1505
        // Predicated region
        $region45: #{attention_forward.3} parent=35 // pred_check
          %p1507 = pneg %p162
        $region46: #{attention_forward.3} parent=35 // pred_check_branch
          %1509 = sbr.rel (%p1507) target = $region48
        $region47: #{attention_forward.3} parent=35 // pred_region
          %s1511 = ssub.s32 128, 128
          %1512 = vsyncadd %s1503, %s1511
          %s1513 = sadd.s32 %s24, %s23
          %s1514 = smul.addr %s1513, 128
          %s1515 = scalar_lea.hbm %s4, %s1514
          %s1517 = sshll.u32 %s1506, 4
          %s1518 = int_to_ptr.vmem [resolvable:$true] %s1517
          %1520 = dma.vmem_to_hbm [thread:$0]  %s1518, 128, %s1515, %s1503
        $region48: #{attention_forward.3} parent=35 // pred_fallthru
          _
      $region36: #{attention_forward.3} parent=5 // pred_fallthru
        _
      %p1521 = scmp.le.s32.totalorder 2, %s13
      // Predicated region
      $region49: #{attention_forward.3} parent=5 // pred_check
        %p1522 = pneg %p1521
      $region50: #{attention_forward.3} parent=5 // pred_check_branch
        %1524 = sbr.rel (%p1522) target = $region52
      $region51: #{attention_forward.3} parent=5 // pred_region
        %s1525 = ssub.s32 %s13, 2
        // Predicated region
        $region53: #{attention_forward.3} parent=51 // pred_check
          %p1526 = pneg %p168
        $region54: #{attention_forward.3} parent=51 // pred_check_branch
          %1528 = sbr.rel (%p1526) target = $region56
        $region55: #{attention_forward.3} parent=51 // pred_region
          %s1529 = sand.u32 %s153, 1
          %s1530 = scalar_lea.sflag [#allocation6], %s1529
          %s1531 = sand.u32 %s153, 1
          %s1532 = smul.addr %s1531, 8
          %s1533 = scalar_lea.vmem [#allocation5], %s1532
          %1534 = dma.done %s1530, 128
        $region56: #{attention_forward.3} parent=51 // pred_fallthru
          _
      $region52: #{attention_forward.3} parent=5 // pred_fallthru
        _
    $region6: #{attention_forward.3} parent=1 // loop_footer
      %s17 = sadd.s32 1, %s13
    $region7: #{attention_forward.3} parent=1 // loop_footer_branch
      %12 = sbr.rel target = $region3
    $region8: #{attention_forward.3} parent=1 // loop_exit
      _
    %1535 = vsyncpa [#allocation6], 1
    %s1536 = scalar_lea.sflag [#allocation6], 1
    %1537 = vsyncpa %s1536, 1

</llo_original>
